<compile_context>
chip_gen: v5e
topology: v5e:2x2
jax: 0.10.0
libtpu: 0.0.40
codegen_flags: <defaults>
</compile_context>

<pallas_src>
import functools

import jax
import jax.numpy as jnp
from jax.experimental import pallas as pl
from jax.experimental.pallas import tpu as pltpu


# ----------------------------------------------------------------------------
# Small helpers
# ----------------------------------------------------------------------------
def _ln_f32(x, g, b, eps=1e-5):
    """LayerNorm over the last axis, f32 math."""
    mu = jnp.mean(x, axis=-1, keepdims=True)
    xc = x - mu
    var = jnp.mean(xc * xc, axis=-1, keepdims=True)
    return xc * jax.lax.rsqrt(var + eps) * g + b


def _full_spec(shape):
    """BlockSpec for an array kept whole (same block at every grid step)."""
    nd = len(shape)
    return pl.BlockSpec(shape, lambda *_: (0,) * nd)


def _pick_batch_tile(batch, seq):
    """Batch elements per encoder-layer grid step.

    Aim for two 'parallel' grid steps (keeps both v7x TensorCores busy) with
    the largest tile that divides evenly; cap rows/block to bound VMEM.
    """
    bt = batch
    if batch % 2 == 0 and batch > 1:
        bt = batch // 2
    while bt > 1 and bt * seq > 1024 and bt % 2 == 0:
        bt //= 2
    return bt


def _pick_row_tile(n):
    """Row tile for the small linear kernels.

    Single block unless the row count is large — splitting a tiny matmul into
    several grid steps only adds ~0.35 us fixed per-step overhead.
    """
    if n <= 512:
        return n
    for cand in (512, 256, 128):
        if n % cand == 0:
            return cand
    return n


# ----------------------------------------------------------------------------
# Linear kernel (embedding / final fc) — fused bias (+ReLU), bf16 MXU inputs
# ----------------------------------------------------------------------------
def _linear_kernel(x_ref, w_ref, b_ref, o_ref, *, relu):
    x = x_ref[...].astype(jnp.bfloat16)
    y = jnp.dot(x, w_ref[...], preferred_element_type=jnp.float32)
    y = y + b_ref[...]
    if relu:
        y = jnp.maximum(y, 0.0)
    o_ref[...] = y.astype(o_ref.dtype)


def linear(x2d, w, b, relu=False):
    """y = x2d @ w + b, optionally ReLU."""
    n, k = x2d.shape
    out = w.shape[1]
    tm = _pick_row_tile(n)
    grid = (n // tm,)
    return pl.pallas_call(
        functools.partial(_linear_kernel, relu=relu),
        grid=grid,
        in_specs=[
            pl.BlockSpec((tm, k), lambda i: (i, 0)),
            _full_spec((k, out)),
            _full_spec((1, out)),
        ],
        out_specs=pl.BlockSpec((tm, out), lambda i: (i, 0)),
        out_shape=jax.ShapeDtypeStruct((n, out), x2d.dtype),
        compiler_params=pltpu.CompilerParams(dimension_semantics=("parallel",)),
    )(x2d, w, b.reshape(1, out))


# ----------------------------------------------------------------------------
# Fully fused TransformerEncoderLayer kernel
#   One grid step == `n_batch` batch elements; everything stays in VMEM/vregs.
# ----------------------------------------------------------------------------
def _encoder_layer_kernel(
    x_ref,
    inw_ref, inb_ref,            # in_proj  (H, 3H) bf16, (1, 3H) f32
    outw_ref, outb_ref,          # out_proj (H, H)  bf16, (1, H)  f32
    ln1g_ref, ln1b_ref,          # LayerNorm 1
    w1_ref, b1_ref,              # FFN up   (H, FF) bf16, (1, FF) f32
    w2_ref, b2_ref,              # FFN down (FF, H) bf16, (1, H)  f32
    ln2g_ref, ln2b_ref,          # LayerNorm 2
    o_ref,
    attn_ref,                    # VMEM scratch (rows, H) f32
    *, num_heads, n_batch, seq, scale, ff_chunk,
):
    x = x_ref[...].astype(jnp.float32)                        # (rows, H)
    rows, H = x.shape
    Dh = H // num_heads

    # --- self attention: QKV projection (bf16 MXU, f32 accumulate) -----------
    qkv = jnp.dot(x.astype(jnp.bfloat16), inw_ref[...],
                  preferred_element_type=jnp.float32)
    qkv = qkv + inb_ref[...]                                   # (rows, 3H) f32

    # Per-(batch, head) SDPA; head outputs land directly in their final lane
    # slice of the VMEM scratch (no concat, no simultaneously-live heads).
    for bi in range(n_batch):                                  # static unroll
        r0 = bi * seq
        q_b = qkv[r0:r0 + seq, :H] * scale                     # scale folded into q
        k_b = qkv[r0:r0 + seq, H:2 * H]
        v_b = qkv[r0:r0 + seq, 2 * H:3 * H]
        for h in range(num_heads):                             # static unroll
            c0 = h * Dh
            qh = q_b[:, c0:c0 + Dh].astype(jnp.bfloat16)
            kh = k_b[:, c0:c0 + Dh].astype(jnp.bfloat16)
            vh = v_b[:, c0:c0 + Dh].astype(jnp.bfloat16)
            # s = qh @ kh.T without materializing a transpose
            s = jax.lax.dot_general(
                qh, kh, (((1,), (1,)), ((), ())),
                preferred_element_type=jnp.float32)            # (S, S) f32
            m = jnp.max(s, axis=-1, keepdims=True)
            p = jnp.exp(s - m)
            # TODO(synk): use exact division when verifying tight tolerances.
            p = p * pl.reciprocal(jnp.sum(p, axis=-1, keepdims=True), approx=True)
            attn_ref[r0:r0 + seq, c0:c0 + Dh] = jnp.dot(
                p.astype(jnp.bfloat16), vh,
                preferred_element_type=jnp.float32)            # (S, Dh)

    attn = jnp.dot(attn_ref[...].astype(jnp.bfloat16), outw_ref[...],
                   preferred_element_type=jnp.float32)
    attn = attn + outb_ref[...]

    # --- residual + LayerNorm 1 (post-norm) ----------------------------------
    y1 = _ln_f32(x + attn, ln1g_ref[...], ln1b_ref[...])

    # --- feed forward, chunked over the FF dimension --------------------------
    y1_bf = y1.astype(jnp.bfloat16)
    FF = w1_ref.shape[1]
    acc = jnp.zeros((rows, H), jnp.float32)
    for c in range(FF // ff_chunk):                            # static unroll
        f0 = c * ff_chunk
        hidden = jnp.dot(y1_bf, w1_ref[:, f0:f0 + ff_chunk],
                         preferred_element_type=jnp.float32)
        hidden = jnp.maximum(hidden + b1_ref[:, f0:f0 + ff_chunk], 0.0)
        acc = acc + jnp.dot(hidden.astype(jnp.bfloat16),
                            w2_ref[f0:f0 + ff_chunk, :],
                            preferred_element_type=jnp.float32)
    ff = acc + b2_ref[...]

    # --- residual + LayerNorm 2 ----------------------------------------------
    y2 = _ln_f32(y1 + ff, ln2g_ref[...], ln2b_ref[...])
    o_ref[...] = y2.astype(o_ref.dtype)


def encoder_layer(x2d, p, num_heads, batch, seq):
    """One fused encoder layer. x2d: (batch*seq, hidden), batch-major rows."""
    H = x2d.shape[1]
    FF = p["ffn_w1"].shape[1]
    Dh = H // num_heads
    scale = Dh ** -0.5

    bt = _pick_batch_tile(batch, seq)
    rows = bt * seq
    grid = (batch // bt,)
    ff_chunk = 512 if (FF % 512 == 0 and FF > 512) else FF

    row_spec = pl.BlockSpec((rows, H), lambda b: (b, 0))
    args = (
        x2d,
        p["in_proj_w"], p["in_proj_b"].reshape(1, 3 * H),
        p["out_proj_w"], p["out_proj_b"].reshape(1, H),
        p["ln1_g"].reshape(1, H), p["ln1_b"].reshape(1, H),
        p["ffn_w1"], p["ffn_b1"].reshape(1, FF),
        p["ffn_w2"], p["ffn_b2"].reshape(1, H),
        p["ln2_g"].reshape(1, H), p["ln2_b"].reshape(1, H),
    )
    in_specs = [row_spec] + [_full_spec(a.shape) for a in args[1:]]

    # Advisory cost estimate so XLA schedules surrounding ops sensibly.
    n_rows = batch * seq
    flops = (2 * n_rows * (3 * H * H + H * H + 2 * H * FF)     # projections + FFN
             + 4 * batch * seq * seq * H)                      # scores + p@v
    transcendentals = batch * num_heads * seq * seq            # softmax exp
    bytes_accessed = (2 * n_rows * H * 4                       # act in/out (f32)
                      + (3 * H * H + H * H + 2 * H * FF) * 2   # bf16 weights
                      + (3 * H + H + FF + H + 4 * H) * 4)      # biases + LN params
    cost = pl.CostEstimate(flops=int(flops),
                           transcendentals=int(transcendentals),
                           bytes_accessed=int(bytes_accessed))

    return pl.pallas_call(
        functools.partial(_encoder_layer_kernel, num_heads=num_heads,
                          n_batch=bt, seq=seq, scale=scale, ff_chunk=ff_chunk),
        grid=grid,
        in_specs=in_specs,
        out_specs=row_spec,
        out_shape=jax.ShapeDtypeStruct(x2d.shape, x2d.dtype),
        scratch_shapes=[pltpu.VMEM((rows, H), jnp.float32)],
        compiler_params=pltpu.CompilerParams(
            dimension_semantics=("parallel",),
            vmem_limit_bytes=48 * 1024 * 1024),
        cost_estimate=cost,
    )(*args)


# ----------------------------------------------------------------------------
# Model forward (glue in plain JAX, hot paths fused in Pallas)
# ----------------------------------------------------------------------------
def transformer_forward(x, params, num_heads):
    B, S, in_dim = x.shape
    H = params["embed_w"].shape[1]
    h = linear(x.reshape(B * S, in_dim), params["embed_w"], params["embed_b"])
    for layer_p in params["layers"]:
        h = encoder_layer(h, layer_p, num_heads, B, S)
    last = h.reshape(B, S, H)[:, -1, :]                        # x[:, -1, :]
    return linear(last, params["fc_w"], params["fc_b"])


# ----------------------------------------------------------------------------
# Deterministic parameter construction
# ----------------------------------------------------------------------------
def init_params(key, input_dim, hidden_dim, num_layers, output_dim,
                dim_feedforward=2048):
    def dense(k, fan_in, fan_out):
        kw, kb = jax.random.split(k)
        w = jax.random.normal(kw, (fan_in, fan_out), jnp.float32) * 0.02
        b = jax.random.normal(kb, (fan_out,), jnp.float32) * 0.02
        return w, b

    keys = jax.random.split(key, 2 + num_layers)
    embed_w, embed_b = dense(keys[0], input_dim, hidden_dim)
    fc_w, fc_b = dense(keys[1], hidden_dim, output_dim)

    layers = []
    for li in range(num_layers):
        k0, k1, k2, k3 = jax.random.split(keys[2 + li], 4)
        in_proj_w, in_proj_b = dense(k0, hidden_dim, 3 * hidden_dim)
        out_proj_w, out_proj_b = dense(k1, hidden_dim, hidden_dim)
        ffn_w1, ffn_b1 = dense(k2, hidden_dim, dim_feedforward)
        ffn_w2, ffn_b2 = dense(k3, dim_feedforward, hidden_dim)
        layers.append(
            dict(
                in_proj_w=in_proj_w, in_proj_b=in_proj_b,
                out_proj_w=out_proj_w, out_proj_b=out_proj_b,
                ffn_w1=ffn_w1, ffn_b1=ffn_b1,
                ffn_w2=ffn_w2, ffn_b2=ffn_b2,
                ln1_g=jnp.ones((hidden_dim,), jnp.float32),
                ln1_b=jnp.zeros((hidden_dim,), jnp.float32),
                ln2_g=jnp.ones((hidden_dim,), jnp.float32),
                ln2_b=jnp.zeros((hidden_dim,), jnp.float32),
            )
        )
    return dict(embed_w=embed_w, embed_b=embed_b, fc_w=fc_w, fc_b=fc_b,
                layers=layers)


def cast_matmul_weights_bf16(params):
    """Store 2-D matmul weights as bf16 (halves DMA bytes / VMEM residency).

    Biases and LayerNorm parameters stay f32; MXU accumulation is f32.
    Note: if importing PyTorch weights, transpose (they are (out,in), x@W.T).
    """
    new = dict(params)
    new["embed_w"] = params["embed_w"].astype(jnp.bfloat16)
    new["fc_w"] = params["fc_w"].astype(jnp.bfloat16)
    new_layers = []
    for lp in params["layers"]:
        nlp = dict(lp)
        for k in ("in_proj_w", "out_proj_w", "ffn_w1", "ffn_w2"):
            nlp[k] = lp[k].astype(jnp.bfloat16)
        new_layers.append(nlp)
    new["layers"] = new_layers
    return new


# ----------------------------------------------------------------------------
if __name__ == "__main__":
    # TransformerModel(input_dim=16, hidden_dim=32, num_layers=2,
    #                  num_heads=4, output_dim=8)
    input_dim, hidden_dim, num_layers, num_heads, output_dim = 16, 32, 2, 4, 8
    batch, seq = 2, 8

    key = jax.random.PRNGKey(0)
    k_x, k_p = jax.random.split(key)
    x = jax.random.normal(k_x, (batch, seq, input_dim), jnp.float32)
    params = init_params(k_p, input_dim, hidden_dim, num_layers, output_dim)
    params = cast_matmul_weights_bf16(params)

    fwd = jax.jit(functools.partial(transformer_forward, num_heads=num_heads))
    out = fwd(x, params)
    out = jax.block_until_ready(out)
    assert out.shape == (batch, output_dim), out.shape
    assert jnp.all(jnp.isfinite(out))
    print("KERNEL_OK")
</pallas_src>

<mosaic_0001>
module attributes {stable_mosaic.version = 11 : i64} {
  func.func @_linear_kernel(%arg0: i32, %arg1: memref<16x16xf32, #tpu.memory_space<vmem>>, %arg2: memref<16x32xbf16, #tpu.memory_space<vmem>>, %arg3: memref<1x32xf32, #tpu.memory_space<vmem>>, %arg4: memref<16x32xf32, #tpu.memory_space<vmem>>) attributes {dimension_semantics = [#tpu.dimension_semantics<parallel>], iteration_bounds = array<i64: 1>, scalar_prefetch = 0 : i64, scratch_operands = 0 : i64, tpu.core_type = #tpu.core_type<tc>, window_params = [{transform_indices = @transform_0, window_bounds = array<i64: 16, 16>}, {pipeline_mode = #tpu.pipeline_mode<synchronous>, transform_indices = @transform_1, window_bounds = array<i64: 16, 32>}, {pipeline_mode = #tpu.pipeline_mode<synchronous>, transform_indices = @transform_2, window_bounds = array<i64: 1, 32>}, {transform_indices = @transform_3, window_bounds = array<i64: 16, 32>}]} {
    %c0 = arith.constant 0 : index
    %c0_0 = arith.constant 0 : index
    %0 = vector.load %arg1[%c0, %c0_0] : memref<16x16xf32, #tpu.memory_space<vmem>>, vector<16x16xf32>
    %1 = arith.truncf %0 : vector<16x16xf32> to vector<16x16xbf16>
    %c0_1 = arith.constant 0 : index
    %c0_2 = arith.constant 0 : index
    %2 = vector.load %arg2[%c0_1, %c0_2] : memref<16x32xbf16, #tpu.memory_space<vmem>>, vector<16x32xbf16>
    %cst = arith.constant dense<0.000000e+00> : vector<16x32xf32>
    %3 = tpu.matmul %1, %2, %cst {dimension_numbers = #tpu.dot_dimension_numbers<[1], [0], [0], [1], [0, 0, 1, 1], [], []>} : vector<16x16xbf16>, vector<16x32xbf16>, vector<16x32xf32> -> vector<16x32xf32>
    %c0_3 = arith.constant 0 : index
    %c0_4 = arith.constant 0 : index
    %4 = vector.load %arg3[%c0_3, %c0_4] : memref<1x32xf32, #tpu.memory_space<vmem>>, vector<1x32xf32>
    %5 = vector.broadcast %4 : vector<1x32xf32> to vector<16x32xf32>
    %6 = arith.addf %3, %5 : vector<16x32xf32>
    %c0_5 = arith.constant 0 : index
    %c0_6 = arith.constant 0 : index
    %7 = vector.load %arg4[%c0_5, %c0_6] : memref<16x32xf32, #tpu.memory_space<vmem>>, vector<16x32xf32>
    tpu.vector_store %arg4[%c0_5, %c0_6], %6 {strides = array<i32>} : memref<16x32xf32, #tpu.memory_space<vmem>>, vector<16x32xf32>,
    return
  }
  func.func @transform_0(%arg0: i32) -> (i32, i32) {
    %c0_i32 = arith.constant 0 : i32
    %c0_i32_0 = arith.constant 0 : i32
    return %arg0, %c0_i32 : i32, i32
  }
  func.func @transform_1(%arg0: i32) -> (i32, i32) {
    %c0_i32 = arith.constant 0 : i32
    %c0_i32_0 = arith.constant 0 : i32
    %c0_i32_1 = arith.constant 0 : i32
    return %c0_i32, %c0_i32_0 : i32, i32
  }
  func.func @transform_2(%arg0: i32) -> (i32, i32) {
    %c0_i32 = arith.constant 0 : i32
    %c0_i32_0 = arith.constant 0 : i32
    %c0_i32_1 = arith.constant 0 : i32
    return %c0_i32, %c0_i32_0 : i32, i32
  }
  func.func @transform_3(%arg0: i32) -> (i32, i32) {
    %c0_i32 = arith.constant 0 : i32
    %c0_i32_0 = arith.constant 0 : i32
    return %arg0, %c0_i32 : i32, i32
  }
}

module attributes {stable_mosaic.version = 11 : i64} {
  func.func @_encoder_layer_kernel(%arg0: i32, %arg1: memref<8x32xf32, #tpu.memory_space<vmem>>, %arg2: memref<32x96xbf16, #tpu.memory_space<vmem>>, %arg3: memref<1x96xf32, #tpu.memory_space<vmem>>, %arg4: memref<32x32xbf16, #tpu.memory_space<vmem>>, %arg5: memref<1x32xf32, #tpu.memory_space<vmem>>, %arg6: memref<1x32xf32, #tpu.memory_space<vmem>>, %arg7: memref<1x32xf32, #tpu.memory_space<vmem>>, %arg8: memref<32x2048xbf16, #tpu.memory_space<vmem>>, %arg9: memref<1x2048xf32, #tpu.memory_space<vmem>>, %arg10: memref<2048x32xbf16, #tpu.memory_space<vmem>>, %arg11: memref<1x32xf32, #tpu.memory_space<vmem>>, %arg12: memref<1x32xf32, #tpu.memory_space<vmem>>, %arg13: memref<1x32xf32, #tpu.memory_space<vmem>>, %arg14: memref<8x32xf32, #tpu.memory_space<vmem>>, %arg15: memref<8x32xf32, #tpu.memory_space<vmem>>) attributes {dimension_semantics = [#tpu.dimension_semantics<parallel>], iteration_bounds = array<i64: 2>, scalar_prefetch = 0 : i64, scratch_operands = 1 : i64, tpu.core_type = #tpu.core_type<tc>, window_params = [{transform_indices = @transform_0, window_bounds = array<i64: 8, 32>}, {pipeline_mode = #tpu.pipeline_mode<synchronous>, transform_indices = @transform_1, window_bounds = array<i64: 32, 96>}, {pipeline_mode = #tpu.pipeline_mode<synchronous>, transform_indices = @transform_2, window_bounds = array<i64: 1, 96>}, {pipeline_mode = #tpu.pipeline_mode<synchronous>, transform_indices = @transform_3, window_bounds = array<i64: 32, 32>}, {pipeline_mode = #tpu.pipeline_mode<synchronous>, transform_indices = @transform_4, window_bounds = array<i64: 1, 32>}, {pipeline_mode = #tpu.pipeline_mode<synchronous>, transform_indices = @transform_5, window_bounds = array<i64: 1, 32>}, {pipeline_mode = #tpu.pipeline_mode<synchronous>, transform_indices = @transform_6, window_bounds = array<i64: 1, 32>}, {pipeline_mode = #tpu.pipeline_mode<synchronous>, transform_indices = @transform_7, window_bounds = array<i64: 32, 2048>}, {pipeline_mode = #tpu.pipeline_mode<synchronous>, transform_indices = @transform_8, window_bounds = array<i64: 1, 2048>}, {pipeline_mode = #tpu.pipeline_mode<synchronous>, transform_indices = @transform_9, window_bounds = array<i64: 2048, 32>}, {pipeline_mode = #tpu.pipeline_mode<synchronous>, transform_indices = @transform_10, window_bounds = array<i64: 1, 32>}, {pipeline_mode = #tpu.pipeline_mode<synchronous>, transform_indices = @transform_11, window_bounds = array<i64: 1, 32>}, {pipeline_mode = #tpu.pipeline_mode<synchronous>, transform_indices = @transform_12, window_bounds = array<i64: 1, 32>}, {transform_indices = @transform_13, window_bounds = array<i64: 8, 32>}]} {
    %c0 = arith.constant 0 : index
    %c0_0 = arith.constant 0 : index
    %0 = vector.load %arg1[%c0, %c0_0] : memref<8x32xf32, #tpu.memory_space<vmem>>, vector<8x32xf32>
    %1 = arith.truncf %0 : vector<8x32xf32> to vector<8x32xbf16>
    %c0_1 = arith.constant 0 : index
    %c0_2 = arith.constant 0 : index
    %2 = vector.load %arg2[%c0_1, %c0_2] : memref<32x96xbf16, #tpu.memory_space<vmem>>, vector<32x96xbf16>
    %cst = arith.constant dense<0.000000e+00> : vector<8x96xf32>
    %3 = tpu.matmul %1, %2, %cst {dimension_numbers = #tpu.dot_dimension_numbers<[1], [0], [0], [1], [0, 0, 1, 1], [], []>} : vector<8x32xbf16>, vector<32x96xbf16>, vector<8x96xf32> -> vector<8x96xf32>
    %c0_3 = arith.constant 0 : index
    %c0_4 = arith.constant 0 : index
    %4 = vector.load %arg3[%c0_3, %c0_4] : memref<1x96xf32, #tpu.memory_space<vmem>>, vector<1x96xf32>
    %5 = vector.broadcast %4 : vector<1x96xf32> to vector<8x96xf32>
    %6 = arith.addf %3, %5 : vector<8x96xf32>
    %7 = vector.extract_strided_slice %6 {offsets = [0, 0], sizes = [8, 32], strides = [1, 1]} : vector<8x96xf32> to vector<8x32xf32>
    %cst_5 = arith.constant 0.353553385 : f32
    %8 = vector.broadcast %cst_5 : f32 to vector<8x32xf32>
    %9 = arith.mulf %7, %8 : vector<8x32xf32>
    %10 = vector.extract_strided_slice %6 {offsets = [0, 32], sizes = [8, 32], strides = [1, 1]} : vector<8x96xf32> to vector<8x32xf32>
    %11 = vector.extract_strided_slice %6 {offsets = [0, 64], sizes = [8, 32], strides = [1, 1]} : vector<8x96xf32> to vector<8x32xf32>
    %12 = vector.extract_strided_slice %9 {offsets = [0, 0], sizes = [8, 8], strides = [1, 1]} : vector<8x32xf32> to vector<8x8xf32>
    %13 = arith.truncf %12 : vector<8x8xf32> to vector<8x8xbf16>
    %14 = vector.extract_strided_slice %10 {offsets = [0, 0], sizes = [8, 8], strides = [1, 1]} : vector<8x32xf32> to vector<8x8xf32>
    %15 = arith.truncf %14 : vector<8x8xf32> to vector<8x8xbf16>
    %16 = vector.extract_strided_slice %11 {offsets = [0, 0], sizes = [8, 8], strides = [1, 1]} : vector<8x32xf32> to vector<8x8xf32>
    %17 = arith.truncf %16 : vector<8x8xf32> to vector<8x8xbf16>
    %cst_6 = arith.constant dense<0.000000e+00> : vector<8x8xf32>
    %18 = tpu.matmul %13, %15, %cst_6 {dimension_numbers = #tpu.dot_dimension_numbers<[1], [1], [0], [0], [0, 0, 1, 0], [], []>} : vector<8x8xbf16>, vector<8x8xbf16>, vector<8x8xf32> -> vector<8x8xf32>
    %cst_7 = arith.constant dense<0xFF800000> : vector<8xf32>
    %19 = vector.multi_reduction <maximumf>, %18, %cst_7 [1] : vector<8x8xf32> to vector<8xf32>
    %20 = vector.shape_cast %19 : vector<8xf32> to vector<8x1xf32>
    %21 = vector.broadcast %20 : vector<8x1xf32> to vector<8x8xf32>
    %22 = arith.subf %18, %21 : vector<8x8xf32>
    %23 = math.exp %22 : vector<8x8xf32>
    %cst_8 = arith.constant dense<0.000000e+00> : vector<8xf32>
    %24 = vector.multi_reduction <add>, %23, %cst_8 [1] : vector<8x8xf32> to vector<8xf32>
    %25 = vector.shape_cast %24 : vector<8xf32> to vector<8x1xf32>
    %26 = tpu.reciprocal %25 {approx = true} : vector<8x1xf32> -> vector<8x1xf32>
    %27 = vector.broadcast %26 : vector<8x1xf32> to vector<8x8xf32>
    %28 = arith.mulf %23, %27 : vector<8x8xf32>
    %29 = arith.truncf %28 : vector<8x8xf32> to vector<8x8xbf16>
    %cst_9 = arith.constant dense<0.000000e+00> : vector<8x8xf32>
    %30 = tpu.matmul %29, %17, %cst_9 {dimension_numbers = #tpu.dot_dimension_numbers<[1], [0], [0], [1], [0, 0, 1, 1], [], []>} : vector<8x8xbf16>, vector<8x8xbf16>, vector<8x8xf32> -> vector<8x8xf32>
    %c0_10 = arith.constant 0 : index
    %c0_11 = arith.constant 0 : index
    %31 = vector.load %arg15[%c0_10, %c0_11] : memref<8x32xf32, #tpu.memory_space<vmem>>, vector<8x8xf32>
    tpu.vector_store %arg15[%c0_10, %c0_11], %30 {strides = array<i32>} : memref<8x32xf32, #tpu.memory_space<vmem>>, vector<8x8xf32>,
    %32 = vector.extract_strided_slice %9 {offsets = [0, 8], sizes = [8, 8], strides = [1, 1]} : vector<8x32xf32> to vector<8x8xf32>
    %33 = arith.truncf %32 : vector<8x8xf32> to vector<8x8xbf16>
    %34 = vector.extract_strided_slice %10 {offsets = [0, 8], sizes = [8, 8], strides = [1, 1]} : vector<8x32xf32> to vector<8x8xf32>
    %35 = arith.truncf %34 : vector<8x8xf32> to vector<8x8xbf16>
    %36 = vector.extract_strided_slice %11 {offsets = [0, 8], sizes = [8, 8], strides = [1, 1]} : vector<8x32xf32> to vector<8x8xf32>
    %37 = arith.truncf %36 : vector<8x8xf32> to vector<8x8xbf16>
    %cst_12 = arith.constant dense<0.000000e+00> : vector<8x8xf32>
    %38 = tpu.matmul %33, %35, %cst_12 {dimension_numbers = #tpu.dot_dimension_numbers<[1], [1], [0], [0], [0, 0, 1, 0], [], []>} : vector<8x8xbf16>, vector<8x8xbf16>, vector<8x8xf32> -> vector<8x8xf32>
    %cst_13 = arith.constant dense<0xFF800000> : vector<8xf32>
    %39 = vector.multi_reduction <maximumf>, %38, %cst_13 [1] : vector<8x8xf32> to vector<8xf32>
    %40 = vector.shape_cast %39 : vector<8xf32> to vector<8x1xf32>
    %41 = vector.broadcast %40 : vector<8x1xf32> to vector<8x8xf32>
    %42 = arith.subf %38, %41 : vector<8x8xf32>
    %43 = math.exp %42 : vector<8x8xf32>
    %cst_14 = arith.constant dense<0.000000e+00> : vector<8xf32>
    %44 = vector.multi_reduction <add>, %43, %cst_14 [1] : vector<8x8xf32> to vector<8xf32>
    %45 = vector.shape_cast %44 : vector<8xf32> to vector<8x1xf32>
    %46 = tpu.reciprocal %45 {approx = true} : vector<8x1xf32> -> vector<8x1xf32>
    %47 = vector.broadcast %46 : vector<8x1xf32> to vector<8x8xf32>
    %48 = arith.mulf %43, %47 : vector<8x8xf32>
    %49 = arith.truncf %48 : vector<8x8xf32> to vector<8x8xbf16>
    %cst_15 = arith.constant dense<0.000000e+00> : vector<8x8xf32>
    %50 = tpu.matmul %49, %37, %cst_15 {dimension_numbers = #tpu.dot_dimension_numbers<[1], [0], [0], [1], [0, 0, 1, 1], [], []>} : vector<8x8xbf16>, vector<8x8xbf16>, vector<8x8xf32> -> vector<8x8xf32>
    %c0_16 = arith.constant 0 : index
    %c8 = arith.constant 8 : index
    %51 = vector.load %arg15[%c0_16, %c8] : memref<8x32xf32, #tpu.memory_space<vmem>>, vector<8x8xf32>
    tpu.vector_store %arg15[%c0_16, %c8], %50 {strides = array<i32>} : memref<8x32xf32, #tpu.memory_space<vmem>>, vector<8x8xf32>,
    %52 = vector.extract_strided_slice %9 {offsets = [0, 16], sizes = [8, 8], strides = [1, 1]} : vector<8x32xf32> to vector<8x8xf32>
    %53 = arith.truncf %52 : vector<8x8xf32> to vector<8x8xbf16>
    %54 = vector.extract_strided_slice %10 {offsets = [0, 16], sizes = [8, 8], strides = [1, 1]} : vector<8x32xf32> to vector<8x8xf32>
    %55 = arith.truncf %54 : vector<8x8xf32> to vector<8x8xbf16>
    %56 = vector.extract_strided_slice %11 {offsets = [0, 16], sizes = [8, 8], strides = [1, 1]} : vector<8x32xf32> to vector<8x8xf32>
    %57 = arith.truncf %56 : vector<8x8xf32> to vector<8x8xbf16>
    %cst_17 = arith.constant dense<0.000000e+00> : vector<8x8xf32>
    %58 = tpu.matmul %53, %55, %cst_17 {dimension_numbers = #tpu.dot_dimension_numbers<[1], [1], [0], [0], [0, 0, 1, 0], [], []>} : vector<8x8xbf16>, vector<8x8xbf16>, vector<8x8xf32> -> vector<8x8xf32>
    %cst_18 = arith.constant dense<0xFF800000> : vector<8xf32>
    %59 = vector.multi_reduction <maximumf>, %58, %cst_18 [1] : vector<8x8xf32> to vector<8xf32>
    %60 = vector.shape_cast %59 : vector<8xf32> to vector<8x1xf32>
    %61 = vector.broadcast %60 : vector<8x1xf32> to vector<8x8xf32>
    %62 = arith.subf %58, %61 : vector<8x8xf32>
    %63 = math.exp %62 : vector<8x8xf32>
    %cst_19 = arith.constant dense<0.000000e+00> : vector<8xf32>
    %64 = vector.multi_reduction <add>, %63, %cst_19 [1] : vector<8x8xf32> to vector<8xf32>
    %65 = vector.shape_cast %64 : vector<8xf32> to vector<8x1xf32>
    %66 = tpu.reciprocal %65 {approx = true} : vector<8x1xf32> -> vector<8x1xf32>
    %67 = vector.broadcast %66 : vector<8x1xf32> to vector<8x8xf32>
    %68 = arith.mulf %63, %67 : vector<8x8xf32>
    %69 = arith.truncf %68 : vector<8x8xf32> to vector<8x8xbf16>
    %cst_20 = arith.constant dense<0.000000e+00> : vector<8x8xf32>
    %70 = tpu.matmul %69, %57, %cst_20 {dimension_numbers = #tpu.dot_dimension_numbers<[1], [0], [0], [1], [0, 0, 1, 1], [], []>} : vector<8x8xbf16>, vector<8x8xbf16>, vector<8x8xf32> -> vector<8x8xf32>
    %c0_21 = arith.constant 0 : index
    %c16 = arith.constant 16 : index
    %71 = vector.load %arg15[%c0_21, %c16] : memref<8x32xf32, #tpu.memory_space<vmem>>, vector<8x8xf32>
    tpu.vector_store %arg15[%c0_21, %c16], %70 {strides = array<i32>} : memref<8x32xf32, #tpu.memory_space<vmem>>, vector<8x8xf32>,
    %72 = vector.extract_strided_slice %9 {offsets = [0, 24], sizes = [8, 8], strides = [1, 1]} : vector<8x32xf32> to vector<8x8xf32>
    %73 = arith.truncf %72 : vector<8x8xf32> to vector<8x8xbf16>
    %74 = vector.extract_strided_slice %10 {offsets = [0, 24], sizes = [8, 8], strides = [1, 1]} : vector<8x32xf32> to vector<8x8xf32>
    %75 = arith.truncf %74 : vector<8x8xf32> to vector<8x8xbf16>
    %76 = vector.extract_strided_slice %11 {offsets = [0, 24], sizes = [8, 8], strides = [1, 1]} : vector<8x32xf32> to vector<8x8xf32>
    %77 = arith.truncf %76 : vector<8x8xf32> to vector<8x8xbf16>
    %cst_22 = arith.constant dense<0.000000e+00> : vector<8x8xf32>
    %78 = tpu.matmul %73, %75, %cst_22 {dimension_numbers = #tpu.dot_dimension_numbers<[1], [1], [0], [0], [0, 0, 1, 0], [], []>} : vector<8x8xbf16>, vector<8x8xbf16>, vector<8x8xf32> -> vector<8x8xf32>
    %cst_23 = arith.constant dense<0xFF800000> : vector<8xf32>
    %79 = vector.multi_reduction <maximumf>, %78, %cst_23 [1] : vector<8x8xf32> to vector<8xf32>
    %80 = vector.shape_cast %79 : vector<8xf32> to vector<8x1xf32>
    %81 = vector.broadcast %80 : vector<8x1xf32> to vector<8x8xf32>
    %82 = arith.subf %78, %81 : vector<8x8xf32>
    %83 = math.exp %82 : vector<8x8xf32>
    %cst_24 = arith.constant dense<0.000000e+00> : vector<8xf32>
    %84 = vector.multi_reduction <add>, %83, %cst_24 [1] : vector<8x8xf32> to vector<8xf32>
    %85 = vector.shape_cast %84 : vector<8xf32> to vector<8x1xf32>
    %86 = tpu.reciprocal %85 {approx = true} : vector<8x1xf32> -> vector<8x1xf32>
    %87 = vector.broadcast %86 : vector<8x1xf32> to vector<8x8xf32>
    %88 = arith.mulf %83, %87 : vector<8x8xf32>
    %89 = arith.truncf %88 : vector<8x8xf32> to vector<8x8xbf16>
    %cst_25 = arith.constant dense<0.000000e+00> : vector<8x8xf32>
    %90 = tpu.matmul %89, %77, %cst_25 {dimension_numbers = #tpu.dot_dimension_numbers<[1], [0], [0], [1], [0, 0, 1, 1], [], []>} : vector<8x8xbf16>, vector<8x8xbf16>, vector<8x8xf32> -> vector<8x8xf32>
    %c0_26 = arith.constant 0 : index
    %c24 = arith.constant 24 : index
    %91 = vector.load %arg15[%c0_26, %c24] : memref<8x32xf32, #tpu.memory_space<vmem>>, vector<8x8xf32>
    tpu.vector_store %arg15[%c0_26, %c24], %90 {strides = array<i32>} : memref<8x32xf32, #tpu.memory_space<vmem>>, vector<8x8xf32>,
    %c0_27 = arith.constant 0 : index
    %c0_28 = arith.constant 0 : index
    %92 = vector.load %arg15[%c0_27, %c0_28] : memref<8x32xf32, #tpu.memory_space<vmem>>, vector<8x32xf32>
    %93 = arith.truncf %92 : vector<8x32xf32> to vector<8x32xbf16>
    %c0_29 = arith.constant 0 : index
    %c0_30 = arith.constant 0 : index
    %94 = vector.load %arg4[%c0_29, %c0_30] : memref<32x32xbf16, #tpu.memory_space<vmem>>, vector<32x32xbf16>
    %cst_31 = arith.constant dense<0.000000e+00> : vector<8x32xf32>
    %95 = tpu.matmul %93, %94, %cst_31 {dimension_numbers = #tpu.dot_dimension_numbers<[1], [0], [0], [1], [0, 0, 1, 1], [], []>} : vector<8x32xbf16>, vector<32x32xbf16>, vector<8x32xf32> -> vector<8x32xf32>
    %c0_32 = arith.constant 0 : index
    %c0_33 = arith.constant 0 : index
    %96 = vector.load %arg5[%c0_32, %c0_33] : memref<1x32xf32, #tpu.memory_space<vmem>>, vector<1x32xf32>
    %97 = vector.broadcast %96 : vector<1x32xf32> to vector<8x32xf32>
    %98 = arith.addf %95, %97 : vector<8x32xf32>
    %99 = arith.addf %0, %98 : vector<8x32xf32>
    %c0_34 = arith.constant 0 : index
    %c0_35 = arith.constant 0 : index
    %100 = vector.load %arg6[%c0_34, %c0_35] : memref<1x32xf32, #tpu.memory_space<vmem>>, vector<1x32xf32>
    %c0_36 = arith.constant 0 : index
    %c0_37 = arith.constant 0 : index
    %101 = vector.load %arg7[%c0_36, %c0_37] : memref<1x32xf32, #tpu.memory_space<vmem>>, vector<1x32xf32>
    %cst_38 = arith.constant dense<0.000000e+00> : vector<8xf32>
    %102 = vector.multi_reduction <add>, %99, %cst_38 [1] : vector<8x32xf32> to vector<8xf32>
    %103 = vector.shape_cast %102 : vector<8xf32> to vector<8x1xf32>
    %cst_39 = arith.constant 3.200000e+01 : f32
    %104 = vector.broadcast %cst_39 : f32 to vector<8x1xf32>
    %105 = arith.divf %103, %104 : vector<8x1xf32>
    %106 = vector.broadcast %105 : vector<8x1xf32> to vector<8x32xf32>
    %107 = arith.subf %99, %106 : vector<8x32xf32>
    %108 = arith.mulf %107, %107 : vector<8x32xf32>
    %cst_40 = arith.constant dense<0.000000e+00> : vector<8xf32>
    %109 = vector.multi_reduction <add>, %108, %cst_40 [1] : vector<8x32xf32> to vector<8xf32>
    %110 = vector.shape_cast %109 : vector<8xf32> to vector<8x1xf32>
    %cst_41 = arith.constant 3.200000e+01 : f32
    %111 = vector.broadcast %cst_41 : f32 to vector<8x1xf32>
    %112 = arith.divf %110, %111 : vector<8x1xf32>
    %cst_42 = arith.constant 9.99999974E-6 : f32
    %113 = vector.broadcast %cst_42 : f32 to vector<8x1xf32>
    %114 = arith.addf %112, %113 : vector<8x1xf32>
    %115 = math.rsqrt %114 : vector<8x1xf32>
    %116 = vector.broadcast %115 : vector<8x1xf32> to vector<8x32xf32>
    %117 = arith.mulf %107, %116 : vector<8x32xf32>
    %118 = vector.broadcast %100 : vector<1x32xf32> to vector<8x32xf32>
    %119 = arith.mulf %117, %118 : vector<8x32xf32>
    %120 = vector.broadcast %101 : vector<1x32xf32> to vector<8x32xf32>
    %121 = arith.addf %119, %120 : vector<8x32xf32>
    %122 = arith.truncf %121 : vector<8x32xf32> to vector<8x32xbf16>
    %cst_43 = arith.constant 0.000000e+00 : f32
    %123 = vector.broadcast %cst_43 : f32 to vector<8x32xf32>
    %c0_44 = arith.constant 0 : index
    %c0_45 = arith.constant 0 : index
    %124 = vector.load %arg8[%c0_44, %c0_45] : memref<32x2048xbf16, #tpu.memory_space<vmem>>, vector<32x512xbf16>
    %cst_46 = arith.constant dense<0.000000e+00> : vector<8x512xf32>
    %125 = tpu.matmul %122, %124, %cst_46 {dimension_numbers = #tpu.dot_dimension_numbers<[1], [0], [0], [1], [0, 0, 1, 1], [], []>} : vector<8x32xbf16>, vector<32x512xbf16>, vector<8x512xf32> -> vector<8x512xf32>
    %c0_47 = arith.constant 0 : index
    %c0_48 = arith.constant 0 : index
    %126 = vector.load %arg9[%c0_47, %c0_48] : memref<1x2048xf32, #tpu.memory_space<vmem>>, vector<1x512xf32>
    %127 = vector.broadcast %126 : vector<1x512xf32> to vector<8x512xf32>
    %128 = arith.addf %125, %127 : vector<8x512xf32>
    %cst_49 = arith.constant 0.000000e+00 : f32
    %129 = vector.broadcast %cst_49 : f32 to vector<8x512xf32>
    %130 = arith.maximumf %128, %129 : vector<8x512xf32>
    %131 = arith.truncf %130 : vector<8x512xf32> to vector<8x512xbf16>
    %c0_50 = arith.constant 0 : index
    %c0_51 = arith.constant 0 : index
    %132 = vector.load %arg10[%c0_50, %c0_51] : memref<2048x32xbf16, #tpu.memory_space<vmem>>, vector<512x32xbf16>
    %cst_52 = arith.constant dense<0.000000e+00> : vector<8x32xf32>
    %133 = tpu.matmul %131, %132, %cst_52 {dimension_numbers = #tpu.dot_dimension_numbers<[1], [0], [0], [1], [0, 0, 1, 1], [], []>} : vector<8x512xbf16>, vector<512x32xbf16>, vector<8x32xf32> -> vector<8x32xf32>
    %134 = arith.addf %123, %133 : vector<8x32xf32>
    %c0_53 = arith.constant 0 : index
    %c512 = arith.constant 512 : index
    %135 = vector.load %arg8[%c0_53, %c512] : memref<32x2048xbf16, #tpu.memory_space<vmem>>, vector<32x512xbf16>
    %cst_54 = arith.constant dense<0.000000e+00> : vector<8x512xf32>
    %136 = tpu.matmul %122, %135, %cst_54 {dimension_numbers = #tpu.dot_dimension_numbers<[1], [0], [0], [1], [0, 0, 1, 1], [], []>} : vector<8x32xbf16>, vector<32x512xbf16>, vector<8x512xf32> -> vector<8x512xf32>
    %c0_55 = arith.constant 0 : index
    %c512_56 = arith.constant 512 : index
    %137 = vector.load %arg9[%c0_55, %c512_56] : memref<1x2048xf32, #tpu.memory_space<vmem>>, vector<1x512xf32>
    %138 = vector.broadcast %137 : vector<1x512xf32> to vector<8x512xf32>
    %139 = arith.addf %136, %138 : vector<8x512xf32>
    %cst_57 = arith.constant 0.000000e+00 : f32
    %140 = vector.broadcast %cst_57 : f32 to vector<8x512xf32>
    %141 = arith.maximumf %139, %140 : vector<8x512xf32>
    %142 = arith.truncf %141 : vector<8x512xf32> to vector<8x512xbf16>
    %c512_58 = arith.constant 512 : index
    %c0_59 = arith.constant 0 : index
    %143 = vector.load %arg10[%c512_58, %c0_59] : memref<2048x32xbf16, #tpu.memory_space<vmem>>, vector<512x32xbf16>
    %cst_60 = arith.constant dense<0.000000e+00> : vector<8x32xf32>
    %144 = tpu.matmul %142, %143, %cst_60 {dimension_numbers = #tpu.dot_dimension_numbers<[1], [0], [0], [1], [0, 0, 1, 1], [], []>} : vector<8x512xbf16>, vector<512x32xbf16>, vector<8x32xf32> -> vector<8x32xf32>
    %145 = arith.addf %134, %144 : vector<8x32xf32>
    %c0_61 = arith.constant 0 : index
    %c1024 = arith.constant 1024 : index
    %146 = vector.load %arg8[%c0_61, %c1024] : memref<32x2048xbf16, #tpu.memory_space<vmem>>, vector<32x512xbf16>
    %cst_62 = arith.constant dense<0.000000e+00> : vector<8x512xf32>
    %147 = tpu.matmul %122, %146, %cst_62 {dimension_numbers = #tpu.dot_dimension_numbers<[1], [0], [0], [1], [0, 0, 1, 1], [], []>} : vector<8x32xbf16>, vector<32x512xbf16>, vector<8x512xf32> -> vector<8x512xf32>
    %c0_63 = arith.constant 0 : index
    %c1024_64 = arith.constant 1024 : index
    %148 = vector.load %arg9[%c0_63, %c1024_64] : memref<1x2048xf32, #tpu.memory_space<vmem>>, vector<1x512xf32>
    %149 = vector.broadcast %148 : vector<1x512xf32> to vector<8x512xf32>
    %150 = arith.addf %147, %149 : vector<8x512xf32>
    %cst_65 = arith.constant 0.000000e+00 : f32
    %151 = vector.broadcast %cst_65 : f32 to vector<8x512xf32>
    %152 = arith.maximumf %150, %151 : vector<8x512xf32>
    %153 = arith.truncf %152 : vector<8x512xf32> to vector<8x512xbf16>
    %c1024_66 = arith.constant 1024 : index
    %c0_67 = arith.constant 0 : index
    %154 = vector.load %arg10[%c1024_66, %c0_67] : memref<2048x32xbf16, #tpu.memory_space<vmem>>, vector<512x32xbf16>
    %cst_68 = arith.constant dense<0.000000e+00> : vector<8x32xf32>
    %155 = tpu.matmul %153, %154, %cst_68 {dimension_numbers = #tpu.dot_dimension_numbers<[1], [0], [0], [1], [0, 0, 1, 1], [], []>} : vector<8x512xbf16>, vector<512x32xbf16>, vector<8x32xf32> -> vector<8x32xf32>
    %156 = arith.addf %145, %155 : vector<8x32xf32>
    %c0_69 = arith.constant 0 : index
    %c1536 = arith.constant 1536 : index
    %157 = vector.load %arg8[%c0_69, %c1536] : memref<32x2048xbf16, #tpu.memory_space<vmem>>, vector<32x512xbf16>
    %cst_70 = arith.constant dense<0.000000e+00> : vector<8x512xf32>
    %158 = tpu.matmul %122, %157, %cst_70 {dimension_numbers = #tpu.dot_dimension_numbers<[1], [0], [0], [1], [0, 0, 1, 1], [], []>} : vector<8x32xbf16>, vector<32x512xbf16>, vector<8x512xf32> -> vector<8x512xf32>
    %c0_71 = arith.constant 0 : index
    %c1536_72 = arith.constant 1536 : index
    %159 = vector.load %arg9[%c0_71, %c1536_72] : memref<1x2048xf32, #tpu.memory_space<vmem>>, vector<1x512xf32>
    %160 = vector.broadcast %159 : vector<1x512xf32> to vector<8x512xf32>
    %161 = arith.addf %158, %160 : vector<8x512xf32>
    %cst_73 = arith.constant 0.000000e+00 : f32
    %162 = vector.broadcast %cst_73 : f32 to vector<8x512xf32>
    %163 = arith.maximumf %161, %162 : vector<8x512xf32>
    %164 = arith.truncf %163 : vector<8x512xf32> to vector<8x512xbf16>
    %c1536_74 = arith.constant 1536 : index
    %c0_75 = arith.constant 0 : index
    %165 = vector.load %arg10[%c1536_74, %c0_75] : memref<2048x32xbf16, #tpu.memory_space<vmem>>, vector<512x32xbf16>
    %cst_76 = arith.constant dense<0.000000e+00> : vector<8x32xf32>
    %166 = tpu.matmul %164, %165, %cst_76 {dimension_numbers = #tpu.dot_dimension_numbers<[1], [0], [0], [1], [0, 0, 1, 1], [], []>} : vector<8x512xbf16>, vector<512x32xbf16>, vector<8x32xf32> -> vector<8x32xf32>
    %167 = arith.addf %156, %166 : vector<8x32xf32>
    %c0_77 = arith.constant 0 : index
    %c0_78 = arith.constant 0 : index
    %168 = vector.load %arg11[%c0_77, %c0_78] : memref<1x32xf32, #tpu.memory_space<vmem>>, vector<1x32xf32>
    %169 = vector.broadcast %168 : vector<1x32xf32> to vector<8x32xf32>
    %170 = arith.addf %167, %169 : vector<8x32xf32>
    %171 = arith.addf %121, %170 : vector<8x32xf32>
    %c0_79 = arith.constant 0 : index
    %c0_80 = arith.constant 0 : index
    %172 = vector.load %arg12[%c0_79, %c0_80] : memref<1x32xf32, #tpu.memory_space<vmem>>, vector<1x32xf32>
    %c0_81 = arith.constant 0 : index
    %c0_82 = arith.constant 0 : index
    %173 = vector.load %arg13[%c0_81, %c0_82] : memref<1x32xf32, #tpu.memory_space<vmem>>, vector<1x32xf32>
    %cst_83 = arith.constant dense<0.000000e+00> : vector<8xf32>
    %174 = vector.multi_reduction <add>, %171, %cst_83 [1] : vector<8x32xf32> to vector<8xf32>
    %175 = vector.shape_cast %174 : vector<8xf32> to vector<8x1xf32>
    %cst_84 = arith.constant 3.200000e+01 : f32
    %176 = vector.broadcast %cst_84 : f32 to vector<8x1xf32>
    %177 = arith.divf %175, %176 : vector<8x1xf32>
    %178 = vector.broadcast %177 : vector<8x1xf32> to vector<8x32xf32>
    %179 = arith.subf %171, %178 : vector<8x32xf32>
    %180 = arith.mulf %179, %179 : vector<8x32xf32>
    %cst_85 = arith.constant dense<0.000000e+00> : vector<8xf32>
    %181 = vector.multi_reduction <add>, %180, %cst_85 [1] : vector<8x32xf32> to vector<8xf32>
    %182 = vector.shape_cast %181 : vector<8xf32> to vector<8x1xf32>
    %cst_86 = arith.constant 3.200000e+01 : f32
    %183 = vector.broadcast %cst_86 : f32 to vector<8x1xf32>
    %184 = arith.divf %182, %183 : vector<8x1xf32>
    %cst_87 = arith.constant 9.99999974E-6 : f32
    %185 = vector.broadcast %cst_87 : f32 to vector<8x1xf32>
    %186 = arith.addf %184, %185 : vector<8x1xf32>
    %187 = math.rsqrt %186 : vector<8x1xf32>
    %188 = vector.broadcast %187 : vector<8x1xf32> to vector<8x32xf32>
    %189 = arith.mulf %179, %188 : vector<8x32xf32>
    %190 = vector.broadcast %172 : vector<1x32xf32> to vector<8x32xf32>
    %191 = arith.mulf %189, %190 : vector<8x32xf32>
    %192 = vector.broadcast %173 : vector<1x32xf32> to vector<8x32xf32>
    %193 = arith.addf %191, %192 : vector<8x32xf32>
    %c0_88 = arith.constant 0 : index
    %c0_89 = arith.constant 0 : index
    %194 = vector.load %arg14[%c0_88, %c0_89] : memref<8x32xf32, #tpu.memory_space<vmem>>, vector<8x32xf32>
    tpu.vector_store %arg14[%c0_88, %c0_89], %193 {strides = array<i32>} : memref<8x32xf32, #tpu.memory_space<vmem>>, vector<8x32xf32>,
    return
  }
  func.func @transform_0(%arg0: i32) -> (i32, i32) {
    %c0_i32 = arith.constant 0 : i32
    %c0_i32_0 = arith.constant 0 : i32
    return %arg0, %c0_i32 : i32, i32
  }
  func.func @transform_1(%arg0: i32) -> (i32, i32) {
    %c0_i32 = arith.constant 0 : i32
    %c0_i32_0 = arith.constant 0 : i32
    %c0_i32_1 = arith.constant 0 : i32
    return %c0_i32, %c0_i32_0 : i32, i32
  }
  func.func @transform_2(%arg0: i32) -> (i32, i32) {
    %c0_i32 = arith.constant 0 : i32
    %c0_i32_0 = arith.constant 0 : i32
    %c0_i32_1 = arith.constant 0 : i32
    return %c0_i32, %c0_i32_0 : i32, i32
  }
  func.func @transform_3(%arg0: i32) -> (i32, i32) {
    %c0_i32 = arith.constant 0 : i32
    %c0_i32_0 = arith.constant 0 : i32
    %c0_i32_1 = arith.constant 0 : i32
    return %c0_i32, %c0_i32_0 : i32, i32
  }
  func.func @transform_4(%arg0: i32) -> (i32, i32) {
    %c0_i32 = arith.constant 0 : i32
    %c0_i32_0 = arith.constant 0 : i32
    %c0_i32_1 = arith.constant 0 : i32
    return %c0_i32, %c0_i32_0 : i32, i32
  }
  func.func @transform_5(%arg0: i32) -> (i32, i32) {
    %c0_i32 = arith.constant 0 : i32
    %c0_i32_0 = arith.constant 0 : i32
    %c0_i32_1 = arith.constant 0 : i32
    return %c0_i32, %c0_i32_0 : i32, i32
  }
  func.func @transform_6(%arg0: i32) -> (i32, i32) {
    %c0_i32 = arith.constant 0 : i32
    %c0_i32_0 = arith.constant 0 : i32
    %c0_i32_1 = arith.constant 0 : i32
    return %c0_i32, %c0_i32_0 : i32, i32
  }
  func.func @transform_7(%arg0: i32) -> (i32, i32) {
    %c0_i32 = arith.constant 0 : i32
    %c0_i32_0 = arith.constant 0 : i32
    %c0_i32_1 = arith.constant 0 : i32
    return %c0_i32, %c0_i32_0 : i32, i32
  }
  func.func @transform_8(%arg0: i32) -> (i32, i32) {
    %c0_i32 = arith.constant 0 : i32
    %c0_i32_0 = arith.constant 0 : i32
    %c0_i32_1 = arith.constant 0 : i32
    return %c0_i32, %c0_i32_0 : i32, i32
  }
  func.func @transform_9(%arg0: i32) -> (i32, i32) {
    %c0_i32 = arith.constant 0 : i32
    %c0_i32_0 = arith.constant 0 : i32
    %c0_i32_1 = arith.constant 0 : i32
    return %c0_i32, %c0_i32_0 : i32, i32
  }
  func.func @transform_10(%arg0: i32) -> (i32, i32) {
    %c0_i32 = arith.constant 0 : i32
    %c0_i32_0 = arith.constant 0 : i32
    %c0_i32_1 = arith.constant 0 : i32
    return %c0_i32, %c0_i32_0 : i32, i32
  }
  func.func @transform_11(%arg0: i32) -> (i32, i32) {
    %c0_i32 = arith.constant 0 : i32
    %c0_i32_0 = arith.constant 0 : i32
    %c0_i32_1 = arith.constant 0 : i32
    return %c0_i32, %c0_i32_0 : i32, i32
  }
  func.func @transform_12(%arg0: i32) -> (i32, i32) {
    %c0_i32 = arith.constant 0 : i32
    %c0_i32_0 = arith.constant 0 : i32
    %c0_i32_1 = arith.constant 0 : i32
    return %c0_i32, %c0_i32_0 : i32, i32
  }
  func.func @transform_13(%arg0: i32) -> (i32, i32) {
    %c0_i32 = arith.constant 0 : i32
    %c0_i32_0 = arith.constant 0 : i32
    return %arg0, %c0_i32 : i32, i32
  }
}

module attributes {stable_mosaic.version = 11 : i64} {
  func.func @_linear_kernel(%arg0: i32, %arg1: memref<2x32xf32, #tpu.memory_space<vmem>>, %arg2: memref<32x8xbf16, #tpu.memory_space<vmem>>, %arg3: memref<1x8xf32, #tpu.memory_space<vmem>>, %arg4: memref<2x8xf32, #tpu.memory_space<vmem>>) attributes {dimension_semantics = [#tpu.dimension_semantics<parallel>], iteration_bounds = array<i64: 1>, scalar_prefetch = 0 : i64, scratch_operands = 0 : i64, tpu.core_type = #tpu.core_type<tc>, window_params = [{transform_indices = @transform_0, window_bounds = array<i64: 2, 32>}, {pipeline_mode = #tpu.pipeline_mode<synchronous>, transform_indices = @transform_1, window_bounds = array<i64: 32, 8>}, {pipeline_mode = #tpu.pipeline_mode<synchronous>, transform_indices = @transform_2, window_bounds = array<i64: 1, 8>}, {transform_indices = @transform_3, window_bounds = array<i64: 2, 8>}]} {
    %c0 = arith.constant 0 : index
    %c0_0 = arith.constant 0 : index
    %0 = vector.load %arg1[%c0, %c0_0] : memref<2x32xf32, #tpu.memory_space<vmem>>, vector<2x32xf32>
    %1 = arith.truncf %0 : vector<2x32xf32> to vector<2x32xbf16>
    %c0_1 = arith.constant 0 : index
    %c0_2 = arith.constant 0 : index
    %2 = vector.load %arg2[%c0_1, %c0_2] : memref<32x8xbf16, #tpu.memory_space<vmem>>, vector<32x8xbf16>
    %cst = arith.constant dense<0.000000e+00> : vector<2x8xf32>
    %3 = tpu.matmul %1, %2, %cst {dimension_numbers = #tpu.dot_dimension_numbers<[1], [0], [0], [1], [0, 0, 1, 1], [], []>} : vector<2x32xbf16>, vector<32x8xbf16>, vector<2x8xf32> -> vector<2x8xf32>
    %c0_3 = arith.constant 0 : index
    %c0_4 = arith.constant 0 : index
    %4 = vector.load %arg3[%c0_3, %c0_4] : memref<1x8xf32, #tpu.memory_space<vmem>>, vector<1x8xf32>
    %5 = vector.broadcast %4 : vector<1x8xf32> to vector<2x8xf32>
    %6 = arith.addf %3, %5 : vector<2x8xf32>
    %c0_5 = arith.constant 0 : index
    %c0_6 = arith.constant 0 : index
    %7 = vector.load %arg4[%c0_5, %c0_6] : memref<2x8xf32, #tpu.memory_space<vmem>>, vector<2x8xf32>
    tpu.vector_store %arg4[%c0_5, %c0_6], %6 {strides = array<i32>} : memref<2x8xf32, #tpu.memory_space<vmem>>, vector<2x8xf32>,
    return
  }
  func.func @transform_0(%arg0: i32) -> (i32, i32) {
    %c0_i32 = arith.constant 0 : i32
    %c0_i32_0 = arith.constant 0 : i32
    return %arg0, %c0_i32 : i32, i32
  }
  func.func @transform_1(%arg0: i32) -> (i32, i32) {
    %c0_i32 = arith.constant 0 : i32
    %c0_i32_0 = arith.constant 0 : i32
    %c0_i32_1 = arith.constant 0 : i32
    return %c0_i32, %c0_i32_0 : i32, i32
  }
  func.func @transform_2(%arg0: i32) -> (i32, i32) {
    %c0_i32 = arith.constant 0 : i32
    %c0_i32_0 = arith.constant 0 : i32
    %c0_i32_1 = arith.constant 0 : i32
    return %c0_i32, %c0_i32_0 : i32, i32
  }
  func.func @transform_3(%arg0: i32) -> (i32, i32) {
    %c0_i32 = arith.constant 0 : i32
    %c0_i32_0 = arith.constant 0 : i32
    return %arg0, %c0_i32 : i32, i32
  }
}

</mosaic_0001>

<llo_original>
// kernel: transformer_forward.4
$region0: #{transformer_forward.4}
  #allocation0 [shape = 'u32[]', space=smem, size = 0x4, offset = 0x4, fixed_abs, tag = 'smem constant byte address 0x4 - core index']
  #allocation1 [shape = 'u32[72,128]{1,0:T(1,128)}', space=vmem, size = 0x9000, scoped, tag = 'internal scratch']
  %s0 = inlined_call_operand.vmem [shape: f32[16,16], index: 0, kind: input, shape index: {}]
  %s1 = inlined_call_operand.vmem [shape: bf16[16,32], index: 1, kind: input, shape index: {}]
  %s2 = inlined_call_operand.vmem [shape: f32[1,32], index: 2, kind: input, shape index: {}]
  %s3 = inlined_call_operand.vmem [shape: f32[16,32], index: 3, kind: output, shape index: {}]
  %s4 = sld [smem:[#allocation0]]
  $region22: #{transformer_forward.4} parent=0
    _
  %s6 = ssub.s32 1, %s4
  %s7 = scalar_select 0, %s6, %s4
  // Predicated region
  $region2: #{transformer_forward.4} parent=0 // pred_check
    _
  $region3: #{transformer_forward.4} parent=0 // pred_check_branch
    %9 = sbr.rel (0) target = $region5
  $region4: #{transformer_forward.4} parent=0 // pred_region
    _
  $region5: #{transformer_forward.4} parent=0 // pred_fallthru
    _
  // Predicated region
  $region6: #{transformer_forward.4} parent=0 // pred_check
    _
  $region7: #{transformer_forward.4} parent=0 // pred_check_branch
    %11 = sbr.rel (0) target = $region9
  $region8: #{transformer_forward.4} parent=0 // pred_region
    _
  $region9: #{transformer_forward.4} parent=0 // pred_fallthru
    _
  // Predicated region
  $region10: #{transformer_forward.4} parent=0 // pred_check
    _
  $region11: #{transformer_forward.4} parent=0 // pred_check_branch
    %13 = sbr.rel (0) target = $region13
  $region12: #{transformer_forward.4} parent=0 // pred_region
    _
  $region13: #{transformer_forward.4} parent=0 // pred_fallthru
    _
  %v15 = vld [vmem:[%s0] sm:$0xff]
  %v16 = vld [vmem:[%s0 + $0x8] sm:$0xff]
  %v17 = vpack.c.bf16 %v16, %v15
  %v18 = vld [vmem:[%s1] sm:$0xf]
  %v19 = vld [vmem:[%s1 + $0x4] sm:$0xf]
  %v20 = vld [vmem:[%s2] sm:$0x1]
  %v22 = vperm.slane %v20, 0
  %v26 = vunpack.c.l.b16 %v18
  %v27 = vunpack.c.l.b16 %v19
  %v28 = vpack.c.b16 %v27, %v26
  %vm30 = vcmask 130048
  %v32 = vsel %vm30, %v17, 0
  %34 = vmatpush.bf16.msra.mxu0 0
  %35 = vmatpush.bf16.msra.mxu0 0
  %36 = vmatpush.bf16.msra.mxu0 0
  %37 = vmatpush.bf16.msra.mxu0 0
  %38 = vmatpush.bf16.msra.mxu0 0
  %39 = vmatpush.bf16.msra.mxu0 0
  %40 = vmatpush.bf16.msra.mxu0 0
  %41 = vmatpush.bf16.msra.mxu0 %v28
  %42 = vmatmul.bf16.gmra.mxu0 %v32
  %v43 = vpop.f32.mrf.mxu0
  %v44 = vadd.f32 %v22, %v43
  %v45 = vpop.f32.mrf.mxu0
  %v46 = vadd.f32 %v22, %v45
  %47 = vdwg.mxu0
  %vm48 = vcmask 261120
  %49 = vst.msk [vmem:[%s3] sm:$0xff] %vm48, %v44
  %50 = vst.msk [vmem:[%s3 + $0x8] sm:$0xff] %vm48, %v46
  // Predicated region
  $region14: #{transformer_forward.4} parent=0 // pred_check
    _
  $region15: #{transformer_forward.4} parent=0 // pred_check_branch
    %52 = sbr.rel (0) target = $region17
  $region16: #{transformer_forward.4} parent=0 // pred_region
    _
  $region17: #{transformer_forward.4} parent=0 // pred_fallthru
    _
  // Predicated region
  $region18: #{transformer_forward.4} parent=0 // pred_check
    _
  $region19: #{transformer_forward.4} parent=0 // pred_check_branch
    %54 = sbr.rel (0) target = $region21
  $region20: #{transformer_forward.4} parent=0 // pred_region
    _
  $region21: #{transformer_forward.4} parent=0 // pred_fallthru
    _

// kernel: transformer_forward.7
$region0: #{transformer_forward.7}
  #allocation0 [shape = 'u32[]', space=smem, size = 0x4, offset = 0x4, fixed_abs, tag = 'smem constant byte address 0x4 - core index']
  #allocation1 [shape = 'u32[72,128]{1,0:T(1,128)}', space=vmem, size = 0x9000, scoped, tag = 'internal scratch']
  %s0 = inlined_call_operand.vmem [shape: f32[2,32], index: 0, kind: input, shape index: {}]
  %s1 = inlined_call_operand.vmem [shape: bf16[32,8], index: 1, kind: input, shape index: {}]
  %s2 = inlined_call_operand.vmem [shape: f32[1,8], index: 2, kind: input, shape index: {}]
  %s3 = inlined_call_operand.hbm [shape: f32[2,8], index: 3, kind: output, shape index: {}]
  %s4 = sld [smem:[#allocation0]]
  $region22: #{transformer_forward.7} parent=0
    _
  %s6 = ssub.s32 1, %s4
  %s7 = scalar_select 0, %s6, %s4
  $region1: #{transformer_forward.7} parent=0
    #allocation2 [shape = 'u8[1024]{0}', space=vmem, size = 0x400, scoped, tag = 'output window, operand 0, single buffered']
    #allocation3 [shape = 's32[1]{0}', space=sflag, size = 0x4, scoped, tag = 'scoped memory for transformer_forward.7']
    %8 = vsyncpa [#allocation3], 0
    // Predicated region
    $region2: #{transformer_forward.7} parent=1 // pred_check
      _
    $region3: #{transformer_forward.7} parent=1 // pred_check_branch
      %10 = sbr.rel (0) target = $region5
    $region4: #{transformer_forward.7} parent=1 // pred_region
      _
    $region5: #{transformer_forward.7} parent=1 // pred_fallthru
      _
    // Predicated region
    $region6: #{transformer_forward.7} parent=1 // pred_check
      _
    $region7: #{transformer_forward.7} parent=1 // pred_check_branch
      %12 = sbr.rel (0) target = $region9
    $region8: #{transformer_forward.7} parent=1 // pred_region
      _
    $region9: #{transformer_forward.7} parent=1 // pred_fallthru
      _
    // Predicated region
    $region10: #{transformer_forward.7} parent=1 // pred_check
      _
    $region11: #{transformer_forward.7} parent=1 // pred_check_branch
      %14 = sbr.rel (0) target = $region13
    $region12: #{transformer_forward.7} parent=1 // pred_region
      _
    $region13: #{transformer_forward.7} parent=1 // pred_fallthru
      _
    %v16 = vld [vmem:[%s0] sm:$0x3]
    %v17 = vpack.c.bf16 %v16, %v16
    %v18 = vld [vmem:[%s1] sm:$0xf]
    %v19 = vld [vmem:[%s1 + $0x4] sm:$0xf]
    %v20 = vld [vmem:[%s1 + $0x8] sm:$0xf]
    %v21 = vld [vmem:[%s1 + $0xc] sm:$0xf]
    %v22 = vld [vmem:[%s2] sm:$0x1]
    %v24 = vperm.slane %v22, 0
    %v30 = vunpack.c.l.b16 %v18
    %v31 = vunpack.c.l.b16 %v19
    %v32 = vunpack.c.l.b16 %v20
    %v33 = vunpack.c.l.b16 %v21
    %v34 = vpack.c.b16 %v31, %v30
    %v35 = vpack.c.b16 %v33, %v32
    %vm38 = vcmask 261120
    %v40 = vsel %vm38, %v17, 0
    %42 = vmatpush.bf16.msra.mxu0 0
    %43 = vmatpush.bf16.msra.mxu0 0
    %44 = vmatpush.bf16.msra.mxu0 0
    %45 = vmatpush.bf16.msra.mxu0 0
    %46 = vmatpush.bf16.msra.mxu0 0
    %47 = vmatpush.bf16.msra.mxu0 0
    %48 = vmatpush.bf16.msra.mxu0 %v35
    %49 = vmatpush.bf16.msra.mxu0 %v34
    %50 = vmatmul.bf16.gmra.mxu0 %v40
    %v51 = vpop.f32.mrf.mxu0
    %v52 = vadd.f32 %v24, %v51
    %v53 = vpop.f32.mrf.mxu0
    %54 = vdwg.mxu0
    %vm55 = vcmask 58368
    %56 = vst.msk [vmem:[#allocation2] sm:$0x3] %vm55, %v52
    // Predicated region
    $region14: #{transformer_forward.7} parent=1 // pred_check
      _
    $region15: #{transformer_forward.7} parent=1 // pred_check_branch
      %58 = sbr.rel (0) target = $region17
    $region16: #{transformer_forward.7} parent=1 // pred_region
      %60 = vsyncadd [#allocation3], 0
      %s62 = sshll.u32 [#allocation2], 4
      %s63 = int_to_ptr.vmem [resolvable:$true] %s62
      %s64 = sshll.u32 %s3, 4
      %s65 = int_to_ptr.hbm [resolvable:$true] %s64
      %67 = dma.vmem_to_hbm [thread:$0]  %s63, 32, %s65, [#allocation3]
    $region17: #{transformer_forward.7} parent=1 // pred_fallthru
      _
    // Predicated region
    $region18: #{transformer_forward.7} parent=1 // pred_check
      _
    $region19: #{transformer_forward.7} parent=1 // pred_check_branch
      %69 = sbr.rel (0) target = $region21
    $region20: #{transformer_forward.7} parent=1 // pred_region
      %71 = dma.done [#allocation3], 32
    $region21: #{transformer_forward.7} parent=1 // pred_fallthru
      _
    %72 = vsyncpa [#allocation3], 1

// kernel: transformer_forward.5
$region0: #{transformer_forward.5}
  #allocation0 [shape = 'u32[]', space=smem, size = 0x4, offset = 0x4, fixed_abs, tag = 'smem constant byte address 0x4 - core index']
  #allocation1 [shape = 'u32[72,128]{1,0:T(1,128)}', space=vmem, size = 0x9000, scoped, tag = 'internal scratch']
  #allocation2 [shape = 'f32[8,32]{1,0:T(8,128)}', space=vmem, size = 0x1000, scoped, tag = 'scratch operand']
  %s0 = inlined_call_operand.vmem [shape: f32[16,32], index: 0, kind: input, shape index: {}]
  %s1 = inlined_call_operand.vmem [shape: bf16[32,96], index: 1, kind: input, shape index: {}]
  %s2 = inlined_call_operand.vmem [shape: f32[1,96], index: 2, kind: input, shape index: {}]
  %s3 = inlined_call_operand.vmem [shape: bf16[32,32], index: 3, kind: input, shape index: {}]
  %s4 = inlined_call_operand.vmem [shape: f32[1,32], index: 4, kind: input, shape index: {}]
  %s5 = inlined_call_operand.vmem [shape: f32[1,32], index: 5, kind: input, shape index: {}]
  %s6 = inlined_call_operand.vmem [shape: f32[1,32], index: 6, kind: input, shape index: {}]
  %s7 = inlined_call_operand.vmem [shape: bf16[32,2048], index: 7, kind: input, shape index: {}]
  %s8 = inlined_call_operand.vmem [shape: f32[1,2048], index: 8, kind: input, shape index: {}]
  %s9 = inlined_call_operand.vmem [shape: bf16[2048,32], index: 9, kind: input, shape index: {}]
  %s10 = inlined_call_operand.vmem [shape: f32[1,32], index: 10, kind: input, shape index: {}]
  %s11 = inlined_call_operand.vmem [shape: f32[1,32], index: 11, kind: input, shape index: {}]
  %s12 = inlined_call_operand.vmem [shape: f32[1,32], index: 12, kind: input, shape index: {}]
  %s13 = inlined_call_operand.vmem [shape: f32[16,32], index: 13, kind: output, shape index: {}]
  %s14 = sld [smem:[#allocation0]]
  $region85: #{transformer_forward.5} parent=0
    _
  %s16 = ssub.s32 1, %s14
  %s17 = scalar_select 0, %s16, %s14
  loop: start=0, step=1, limit=4
  $region2: #{transformer_forward.5} parent=0 // loop_pre_header
    _
  $region3: #{transformer_forward.5} parent=0 // loop_header
    %s19 = sphi 0, %s23
    %p20 = scmp.ge.s32.totalorder %s19, 4
    %s29 = sphi 0, %s31
    %s32 = sphi 0, %s29
    %s33 = sphi 0, %s32
    %s49 = sphi 0, %s33
    %s53 = sphi 0, %s53
    %s55 = sphi 0, %s53
    %s56 = sphi 0, %s55
    %s70 = sphi 0, %s56
    %s74 = sphi 0, %s74
    %s76 = sphi 0, %s74
    %s77 = sphi 0, %s76
    %s91 = sphi 0, %s77
    %s95 = sphi 0, %s95
    %s97 = sphi 0, %s95
    %s98 = sphi 0, %s97
    %s112 = sphi 0, %s98
    %s116 = sphi 0, %s116
    %s118 = sphi 0, %s116
    %s119 = sphi 0, %s118
    %s133 = sphi 0, %s119
    %s137 = sphi 0, %s137
    %s139 = sphi 0, %s137
    %s140 = sphi 0, %s139
    %s154 = sphi 0, %s140
    %s158 = sphi 0, %s158
    %s160 = sphi 0, %s158
    %s161 = sphi 0, %s160
    %s175 = sphi 0, %s161
    %s179 = sphi 0, %s179
    %s181 = sphi 0, %s179
    %s182 = sphi 0, %s181
    %s196 = sphi 0, %s182
    %s200 = sphi 0, %s200
    %s202 = sphi 0, %s200
    %s203 = sphi 0, %s202
    %s217 = sphi 0, %s203
    %s221 = sphi 0, %s221
    %s223 = sphi 0, %s221
    %s224 = sphi 0, %s223
    %s238 = sphi 0, %s224
    %s242 = sphi 0, %s242
    %s244 = sphi 0, %s242
    %s245 = sphi 0, %s244
    %s259 = sphi 0, %s245
    %s263 = sphi 0, %s263
    %s265 = sphi 0, %s263
    %s266 = sphi 0, %s265
    %s280 = sphi 0, %s266
    %s284 = sphi 0, %s284
    %s286 = sphi 0, %s284
    %s287 = sphi 0, %s286
    %s301 = sphi 0, %s287
    %s307 = sphi 0, %s309
    %s310 = sphi 0, %s307
    %s311 = sphi 0, %s310
    %s327 = sphi 0, %s311
  $region4: #{transformer_forward.5} parent=0 // loop_header_branch
    %22 = sbr.rel (%p20) target = $region8
  $region5: #{transformer_forward.5} parent=0 // loop_body
    %s24 = ssub.s32 %s19, 1
    %s25 = ssub.s32 %s19, 2
    %s26 = sadd.s32 %s19, 1
    %s27 = ssub.s32 %s19, %s26
    %p28 = scmp.eq.s32.totalorder %s27, 0
    %s30 = sadd.s32 %s29, 1
    %s31 = scalar_select %p28, %s29, %s30
    %p34 = pneg %p28
    %p35 = scmp.eq.s32.totalorder %s19, 1
    %p36 = por %p34, %p35
    %p37 = scmp.ne.s32.totalorder %s29, %s32
    %p38 = scmp.eq.s32.totalorder %s19, 0
    %p39 = por %p37, %p38
    %p40 = scmp.ne.s32.totalorder %s29, %s32
    %p41 = scmp.eq.s32.totalorder %s24, 1
    %p42 = por %p40, %p41
    %p43 = scmp.ne.s32.totalorder %s32, %s33
    %p44 = scmp.eq.s32.totalorder %s24, 0
    %p45 = por %p43, %p44
    %p46 = scmp.ne.s32.totalorder %s32, %s33
    %p47 = scmp.eq.s32.totalorder %s25, 1
    %p48 = por %p46, %p47
    %p50 = scmp.ne.s32.totalorder %s33, %s49
    %p51 = scmp.eq.s32.totalorder %s25, 0
    %p52 = por %p50, %p51
    %s54 = sadd.s32 %s53, 1
    %p57 = scmp.eq.s32.totalorder %s19, 1
    %p58 = scmp.ne.s32.totalorder %s53, %s55
    %p59 = scmp.eq.s32.totalorder %s19, 0
    %p60 = por %p58, %p59
    %p61 = scmp.ne.s32.totalorder %s53, %s55
    %p62 = scmp.eq.s32.totalorder %s24, 1
    %p63 = por %p61, %p62
    %p64 = scmp.ne.s32.totalorder %s55, %s56
    %p65 = scmp.eq.s32.totalorder %s24, 0
    %p66 = por %p64, %p65
    %p67 = scmp.ne.s32.totalorder %s55, %s56
    %p68 = scmp.eq.s32.totalorder %s25, 1
    %p69 = por %p67, %p68
    %p71 = scmp.ne.s32.totalorder %s56, %s70
    %p72 = scmp.eq.s32.totalorder %s25, 0
    %p73 = por %p71, %p72
    %s75 = sadd.s32 %s74, 1
    %p78 = scmp.eq.s32.totalorder %s19, 1
    %p79 = scmp.ne.s32.totalorder %s74, %s76
    %p80 = scmp.eq.s32.totalorder %s19, 0
    %p81 = por %p79, %p80
    %p82 = scmp.ne.s32.totalorder %s74, %s76
    %p83 = scmp.eq.s32.totalorder %s24, 1
    %p84 = por %p82, %p83
    %p85 = scmp.ne.s32.totalorder %s76, %s77
    %p86 = scmp.eq.s32.totalorder %s24, 0
    %p87 = por %p85, %p86
    %p88 = scmp.ne.s32.totalorder %s76, %s77
    %p89 = scmp.eq.s32.totalorder %s25, 1
    %p90 = por %p88, %p89
    %p92 = scmp.ne.s32.totalorder %s77, %s91
    %p93 = scmp.eq.s32.totalorder %s25, 0
    %p94 = por %p92, %p93
    %s96 = sadd.s32 %s95, 1
    %p99 = scmp.eq.s32.totalorder %s19, 1
    %p100 = scmp.ne.s32.totalorder %s95, %s97
    %p101 = scmp.eq.s32.totalorder %s19, 0
    %p102 = por %p100, %p101
    %p103 = scmp.ne.s32.totalorder %s95, %s97
    %p104 = scmp.eq.s32.totalorder %s24, 1
    %p105 = por %p103, %p104
    %p106 = scmp.ne.s32.totalorder %s97, %s98
    %p107 = scmp.eq.s32.totalorder %s24, 0
    %p108 = por %p106, %p107
    %p109 = scmp.ne.s32.totalorder %s97, %s98
    %p110 = scmp.eq.s32.totalorder %s25, 1
    %p111 = por %p109, %p110
    %p113 = scmp.ne.s32.totalorder %s98, %s112
    %p114 = scmp.eq.s32.totalorder %s25, 0
    %p115 = por %p113, %p114
    %s117 = sadd.s32 %s116, 1
    %p120 = scmp.eq.s32.totalorder %s19, 1
    %p121 = scmp.ne.s32.totalorder %s116, %s118
    %p122 = scmp.eq.s32.totalorder %s19, 0
    %p123 = por %p121, %p122
    %p124 = scmp.ne.s32.totalorder %s116, %s118
    %p125 = scmp.eq.s32.totalorder %s24, 1
    %p126 = por %p124, %p125
    %p127 = scmp.ne.s32.totalorder %s118, %s119
    %p128 = scmp.eq.s32.totalorder %s24, 0
    %p129 = por %p127, %p128
    %p130 = scmp.ne.s32.totalorder %s118, %s119
    %p131 = scmp.eq.s32.totalorder %s25, 1
    %p132 = por %p130, %p131
    %p134 = scmp.ne.s32.totalorder %s119, %s133
    %p135 = scmp.eq.s32.totalorder %s25, 0
    %p136 = por %p134, %p135
    %s138 = sadd.s32 %s137, 1
    %p141 = scmp.eq.s32.totalorder %s19, 1
    %p142 = scmp.ne.s32.totalorder %s137, %s139
    %p143 = scmp.eq.s32.totalorder %s19, 0
    %p144 = por %p142, %p143
    %p145 = scmp.ne.s32.totalorder %s137, %s139
    %p146 = scmp.eq.s32.totalorder %s24, 1
    %p147 = por %p145, %p146
    %p148 = scmp.ne.s32.totalorder %s139, %s140
    %p149 = scmp.eq.s32.totalorder %s24, 0
    %p150 = por %p148, %p149
    %p151 = scmp.ne.s32.totalorder %s139, %s140
    %p152 = scmp.eq.s32.totalorder %s25, 1
    %p153 = por %p151, %p152
    %p155 = scmp.ne.s32.totalorder %s140, %s154
    %p156 = scmp.eq.s32.totalorder %s25, 0
    %p157 = por %p155, %p156
    %s159 = sadd.s32 %s158, 1
    %p162 = scmp.eq.s32.totalorder %s19, 1
    %p163 = scmp.ne.s32.totalorder %s158, %s160
    %p164 = scmp.eq.s32.totalorder %s19, 0
    %p165 = por %p163, %p164
    %p166 = scmp.ne.s32.totalorder %s158, %s160
    %p167 = scmp.eq.s32.totalorder %s24, 1
    %p168 = por %p166, %p167
    %p169 = scmp.ne.s32.totalorder %s160, %s161
    %p170 = scmp.eq.s32.totalorder %s24, 0
    %p171 = por %p169, %p170
    %p172 = scmp.ne.s32.totalorder %s160, %s161
    %p173 = scmp.eq.s32.totalorder %s25, 1
    %p174 = por %p172, %p173
    %p176 = scmp.ne.s32.totalorder %s161, %s175
    %p177 = scmp.eq.s32.totalorder %s25, 0
    %p178 = por %p176, %p177
    %s180 = sadd.s32 %s179, 1
    %p183 = scmp.eq.s32.totalorder %s19, 1
    %p184 = scmp.ne.s32.totalorder %s179, %s181
    %p185 = scmp.eq.s32.totalorder %s19, 0
    %p186 = por %p184, %p185
    %p187 = scmp.ne.s32.totalorder %s179, %s181
    %p188 = scmp.eq.s32.totalorder %s24, 1
    %p189 = por %p187, %p188
    %p190 = scmp.ne.s32.totalorder %s181, %s182
    %p191 = scmp.eq.s32.totalorder %s24, 0
    %p192 = por %p190, %p191
    %p193 = scmp.ne.s32.totalorder %s181, %s182
    %p194 = scmp.eq.s32.totalorder %s25, 1
    %p195 = por %p193, %p194
    %p197 = scmp.ne.s32.totalorder %s182, %s196
    %p198 = scmp.eq.s32.totalorder %s25, 0
    %p199 = por %p197, %p198
    %s201 = sadd.s32 %s200, 1
    %p204 = scmp.eq.s32.totalorder %s19, 1
    %p205 = scmp.ne.s32.totalorder %s200, %s202
    %p206 = scmp.eq.s32.totalorder %s19, 0
    %p207 = por %p205, %p206
    %p208 = scmp.ne.s32.totalorder %s200, %s202
    %p209 = scmp.eq.s32.totalorder %s24, 1
    %p210 = por %p208, %p209
    %p211 = scmp.ne.s32.totalorder %s202, %s203
    %p212 = scmp.eq.s32.totalorder %s24, 0
    %p213 = por %p211, %p212
    %p214 = scmp.ne.s32.totalorder %s202, %s203
    %p215 = scmp.eq.s32.totalorder %s25, 1
    %p216 = por %p214, %p215
    %p218 = scmp.ne.s32.totalorder %s203, %s217
    %p219 = scmp.eq.s32.totalorder %s25, 0
    %p220 = por %p218, %p219
    %s222 = sadd.s32 %s221, 1
    %p225 = scmp.eq.s32.totalorder %s19, 1
    %p226 = scmp.ne.s32.totalorder %s221, %s223
    %p227 = scmp.eq.s32.totalorder %s19, 0
    %p228 = por %p226, %p227
    %p229 = scmp.ne.s32.totalorder %s221, %s223
    %p230 = scmp.eq.s32.totalorder %s24, 1
    %p231 = por %p229, %p230
    %p232 = scmp.ne.s32.totalorder %s223, %s224
    %p233 = scmp.eq.s32.totalorder %s24, 0
    %p234 = por %p232, %p233
    %p235 = scmp.ne.s32.totalorder %s223, %s224
    %p236 = scmp.eq.s32.totalorder %s25, 1
    %p237 = por %p235, %p236
    %p239 = scmp.ne.s32.totalorder %s224, %s238
    %p240 = scmp.eq.s32.totalorder %s25, 0
    %p241 = por %p239, %p240
    %s243 = sadd.s32 %s242, 1
    %p246 = scmp.eq.s32.totalorder %s19, 1
    %p247 = scmp.ne.s32.totalorder %s242, %s244
    %p248 = scmp.eq.s32.totalorder %s19, 0
    %p249 = por %p247, %p248
    %p250 = scmp.ne.s32.totalorder %s242, %s244
    %p251 = scmp.eq.s32.totalorder %s24, 1
    %p252 = por %p250, %p251
    %p253 = scmp.ne.s32.totalorder %s244, %s245
    %p254 = scmp.eq.s32.totalorder %s24, 0
    %p255 = por %p253, %p254
    %p256 = scmp.ne.s32.totalorder %s244, %s245
    %p257 = scmp.eq.s32.totalorder %s25, 1
    %p258 = por %p256, %p257
    %p260 = scmp.ne.s32.totalorder %s245, %s259
    %p261 = scmp.eq.s32.totalorder %s25, 0
    %p262 = por %p260, %p261
    %s264 = sadd.s32 %s263, 1
    %p267 = scmp.eq.s32.totalorder %s19, 1
    %p268 = scmp.ne.s32.totalorder %s263, %s265
    %p269 = scmp.eq.s32.totalorder %s19, 0
    %p270 = por %p268, %p269
    %p271 = scmp.ne.s32.totalorder %s263, %s265
    %p272 = scmp.eq.s32.totalorder %s24, 1
    %p273 = por %p271, %p272
    %p274 = scmp.ne.s32.totalorder %s265, %s266
    %p275 = scmp.eq.s32.totalorder %s24, 0
    %p276 = por %p274, %p275
    %p277 = scmp.ne.s32.totalorder %s265, %s266
    %p278 = scmp.eq.s32.totalorder %s25, 1
    %p279 = por %p277, %p278
    %p281 = scmp.ne.s32.totalorder %s266, %s280
    %p282 = scmp.eq.s32.totalorder %s25, 0
    %p283 = por %p281, %p282
    %s285 = sadd.s32 %s284, 1
    %p288 = scmp.eq.s32.totalorder %s19, 1
    %p289 = scmp.ne.s32.totalorder %s284, %s286
    %p290 = scmp.eq.s32.totalorder %s19, 0
    %p291 = por %p289, %p290
    %p292 = scmp.ne.s32.totalorder %s284, %s286
    %p293 = scmp.eq.s32.totalorder %s24, 1
    %p294 = por %p292, %p293
    %p295 = scmp.ne.s32.totalorder %s286, %s287
    %p296 = scmp.eq.s32.totalorder %s24, 0
    %p297 = por %p295, %p296
    %p298 = scmp.ne.s32.totalorder %s286, %s287
    %p299 = scmp.eq.s32.totalorder %s25, 1
    %p300 = por %p298, %p299
    %p302 = scmp.ne.s32.totalorder %s287, %s301
    %p303 = scmp.eq.s32.totalorder %s25, 0
    %p304 = por %p302, %p303
    %s305 = ssub.s32 %s19, %s26
    %p306 = scmp.eq.s32.totalorder %s305, 0
    %s308 = sadd.s32 %s307, 1
    %s309 = scalar_select %p306, %s307, %s308
    %p312 = pneg %p306
    %p313 = scmp.eq.s32.totalorder %s19, 1
    %p314 = por %p312, %p313
    %p315 = scmp.ne.s32.totalorder %s307, %s310
    %p316 = scmp.eq.s32.totalorder %s19, 0
    %p317 = por %p315, %p316
    %p318 = scmp.ne.s32.totalorder %s307, %s310
    %p319 = scmp.eq.s32.totalorder %s24, 1
    %p320 = por %p318, %p319
    %p321 = scmp.ne.s32.totalorder %s310, %s311
    %p322 = scmp.eq.s32.totalorder %s24, 0
    %p323 = por %p321, %p322
    %p324 = scmp.ne.s32.totalorder %s310, %s311
    %p325 = scmp.eq.s32.totalorder %s25, 1
    %p326 = por %p324, %p325
    %p328 = scmp.ne.s32.totalorder %s311, %s327
    %p329 = scmp.eq.s32.totalorder %s25, 0
    %p330 = por %p328, %p329
    %p331 = scmp.le.s32.totalorder 1, %s19
    %p332 = scmp.lt.s32.totalorder %s19, 3
    %p333 = pnand %p331, %p332
    %p334 = pneg %p333
    // Predicated region
    $region9: #{transformer_forward.5} parent=5 // pred_check
      _
    $region10: #{transformer_forward.5} parent=5 // pred_check_branch
      %336 = sbr.rel (%p333) target = $region12
    $region11: #{transformer_forward.5} parent=5 // pred_region
      %s337 = ssub.s32 %s19, 1
      // Predicated region
      $region13: #{transformer_forward.5} parent=11 // pred_check
        %p338 = pneg %p66
      $region14: #{transformer_forward.5} parent=11 // pred_check_branch
        %340 = sbr.rel (%p338) target = $region16
      $region15: #{transformer_forward.5} parent=11 // pred_region
        _
      $region16: #{transformer_forward.5} parent=11 // pred_fallthru
        _
      // Predicated region
      $region17: #{transformer_forward.5} parent=11 // pred_check
        %p341 = pneg %p87
      $region18: #{transformer_forward.5} parent=11 // pred_check_branch
        %343 = sbr.rel (%p341) target = $region20
      $region19: #{transformer_forward.5} parent=11 // pred_region
        _
      $region20: #{transformer_forward.5} parent=11 // pred_fallthru
        _
      // Predicated region
      $region21: #{transformer_forward.5} parent=11 // pred_check
        %p344 = pneg %p108
      $region22: #{transformer_forward.5} parent=11 // pred_check_branch
        %346 = sbr.rel (%p344) target = $region24
      $region23: #{transformer_forward.5} parent=11 // pred_region
        _
      $region24: #{transformer_forward.5} parent=11 // pred_fallthru
        _
      // Predicated region
      $region25: #{transformer_forward.5} parent=11 // pred_check
        %p347 = pneg %p129
      $region26: #{transformer_forward.5} parent=11 // pred_check_branch
        %349 = sbr.rel (%p347) target = $region28
      $region27: #{transformer_forward.5} parent=11 // pred_region
        _
      $region28: #{transformer_forward.5} parent=11 // pred_fallthru
        _
      // Predicated region
      $region29: #{transformer_forward.5} parent=11 // pred_check
        %p350 = pneg %p150
      $region30: #{transformer_forward.5} parent=11 // pred_check_branch
        %352 = sbr.rel (%p350) target = $region32
      $region31: #{transformer_forward.5} parent=11 // pred_region
        _
      $region32: #{transformer_forward.5} parent=11 // pred_fallthru
        _
      // Predicated region
      $region33: #{transformer_forward.5} parent=11 // pred_check
        %p353 = pneg %p171
      $region34: #{transformer_forward.5} parent=11 // pred_check_branch
        %355 = sbr.rel (%p353) target = $region36
      $region35: #{transformer_forward.5} parent=11 // pred_region
        _
      $region36: #{transformer_forward.5} parent=11 // pred_fallthru
        _
      // Predicated region
      $region37: #{transformer_forward.5} parent=11 // pred_check
        %p356 = pneg %p192
      $region38: #{transformer_forward.5} parent=11 // pred_check_branch
        %358 = sbr.rel (%p356) target = $region40
      $region39: #{transformer_forward.5} parent=11 // pred_region
        _
      $region40: #{transformer_forward.5} parent=11 // pred_fallthru
        _
      // Predicated region
      $region41: #{transformer_forward.5} parent=11 // pred_check
        %p359 = pneg %p213
      $region42: #{transformer_forward.5} parent=11 // pred_check_branch
        %361 = sbr.rel (%p359) target = $region44
      $region43: #{transformer_forward.5} parent=11 // pred_region
        _
      $region44: #{transformer_forward.5} parent=11 // pred_fallthru
        _
      // Predicated region
      $region45: #{transformer_forward.5} parent=11 // pred_check
        %p362 = pneg %p234
      $region46: #{transformer_forward.5} parent=11 // pred_check_branch
        %364 = sbr.rel (%p362) target = $region48
      $region47: #{transformer_forward.5} parent=11 // pred_region
        _
      $region48: #{transformer_forward.5} parent=11 // pred_fallthru
        _
      // Predicated region
      $region49: #{transformer_forward.5} parent=11 // pred_check
        %p365 = pneg %p255
      $region50: #{transformer_forward.5} parent=11 // pred_check_branch
        %367 = sbr.rel (%p365) target = $region52
      $region51: #{transformer_forward.5} parent=11 // pred_region
        _
      $region52: #{transformer_forward.5} parent=11 // pred_fallthru
        _
      // Predicated region
      $region53: #{transformer_forward.5} parent=11 // pred_check
        %p368 = pneg %p276
      $region54: #{transformer_forward.5} parent=11 // pred_check_branch
        %370 = sbr.rel (%p368) target = $region56
      $region55: #{transformer_forward.5} parent=11 // pred_region
        _
      $region56: #{transformer_forward.5} parent=11 // pred_fallthru
        _
      // Predicated region
      $region57: #{transformer_forward.5} parent=11 // pred_check
        %p371 = pneg %p297
      $region58: #{transformer_forward.5} parent=11 // pred_check_branch
        %373 = sbr.rel (%p371) target = $region60
      $region59: #{transformer_forward.5} parent=11 // pred_region
        _
      $region60: #{transformer_forward.5} parent=11 // pred_fallthru
        _
    $region12: #{transformer_forward.5} parent=5 // pred_fallthru
      _
    %p374 = scmp.lt.s32.totalorder %s19, 2
    // Predicated region
    $region61: #{transformer_forward.5} parent=5 // pred_check
      %p375 = pneg %p374
    $region62: #{transformer_forward.5} parent=5 // pred_check_branch
      %377 = sbr.rel (%p375) target = $region64
    $region63: #{transformer_forward.5} parent=5 // pred_region
      // Predicated region
      $region65: #{transformer_forward.5} parent=63 // pred_check
        %p378 = pneg %p39
      $region66: #{transformer_forward.5} parent=63 // pred_check_branch
        %380 = sbr.rel (%p378) target = $region68
      $region67: #{transformer_forward.5} parent=63 // pred_region
        %p381 = scmp.lt.s32.totalorder %s19, 1
        %s382 = scalar_select %p381, %s19, 1
        %s383 = smul.addr %s382, 8
        %s384 = scalar_lea.vmem %s0, %s383
      $region68: #{transformer_forward.5} parent=63 // pred_fallthru
        _
    $region64: #{transformer_forward.5} parent=5 // pred_fallthru
      _
    %p385 = scmp.le.s32.totalorder 1, %s19
    %p386 = scmp.lt.s32.totalorder %s19, 3
    %p387 = pnand %p385, %p386
    %p388 = pneg %p387
    // Predicated region
    $region69: #{transformer_forward.5} parent=5 // pred_check
      _
    $region70: #{transformer_forward.5} parent=5 // pred_check_branch
      %390 = sbr.rel (%p387) target = $region72
    $region71: #{transformer_forward.5} parent=5 // pred_region
      %s391 = ssub.s32 %s19, 1
      %p392 = scmp.lt.s32.totalorder %s24, 1
      %s393 = scalar_select %p392, %s24, 1
      %s394 = smul.addr %s393, 8
      %s395 = scalar_lea.vmem %s0, %s394
      %p396 = pneg %p45
      %p397 = pneg %p42
      %p398 = pneg %p66
      %p399 = pneg %p63
      %p400 = pneg %p87
      %p401 = pneg %p84
      %p402 = pneg %p108
      %p403 = pneg %p105
      %p404 = pneg %p129
      %p405 = pneg %p126
      %p406 = pneg %p150
      %p407 = pneg %p147
      %p408 = pneg %p171
      %p409 = pneg %p168
      %p410 = pneg %p192
      %p411 = pneg %p189
      %p412 = pneg %p213
      %p413 = pneg %p210
      %p414 = pneg %p234
      %p415 = pneg %p231
      %p416 = pneg %p255
      %p417 = pneg %p252
      %p418 = pneg %p276
      %p419 = pneg %p273
      %p420 = pneg %p297
      %p421 = pneg %p294
      %p422 = pneg %p323
      %p423 = pneg %p320
      %p424 = scmp.lt.s32.totalorder %s24, 1
      %s425 = scalar_select %p424, %s24, 1
      %s426 = smul.addr %s425, 8
      %s427 = scalar_lea.vmem %s13, %s426
      %p428 = scmp.lt.s32.totalorder %s24, 1
      %s429 = scalar_select %p428, %s24, 1
      %s430 = smul.addr %s429, 8
      %s431 = scalar_lea.vmem %s0, %s430
      %p432 = scmp.lt.s32.totalorder %s24, 1
      %s433 = scalar_select %p432, %s24, 1
      %s434 = smul.addr %s433, 8
      %s435 = scalar_lea.vmem %s13, %s434
      %v437 = vld [vmem:[%s431] sm:$0xff]
      %v438 = vpack.c.bf16 %v437, %v437
      %v439 = vld [vmem:[%s1] sm:$0xf]
      %v440 = vld [vmem:[%s1 + $0x4] sm:$0xf]
      %v441 = vld [vmem:[%s1 + $0x8] sm:$0xf]
      %v442 = vld [vmem:[%s1 + $0xc] sm:$0xf]
      %v443 = vld [vmem:[%s2] sm:$0x1]
      %v445 = vperm.slane %v443, 0
      %v451 = vunpack.c.l.b16 %v439
      %v452 = vunpack.c.l.b16 %v440
      %v453 = vunpack.c.l.b16 %v441
      %v454 = vunpack.c.l.b16 %v442
      %v455 = vpack.c.b16 %v452, %v451
      %v456 = vpack.c.b16 %v454, %v453
      %vm459 = vcmask 261120
      %v461 = vsel %vm459, %v438, 0
      %463 = vmatpush.bf16.msra.mxu0 0
      %464 = vmatpush.bf16.msra.mxu0 0
      %465 = vmatpush.bf16.msra.mxu0 0
      %466 = vmatpush.bf16.msra.mxu0 0
      %467 = vmatpush.bf16.msra.mxu0 0
      %468 = vmatpush.bf16.msra.mxu0 0
      %469 = vmatpush.bf16.msra.mxu0 %v456
      %470 = vmatpush.bf16.msra.mxu0 %v455
      %471 = vmatmul.bf16.gmra.mxu0 %v461
      %v472 = vpop.f32.mrf.mxu0
      %v473 = vadd.f32 %v445, %v472
      %v474 = vpop.f32.mrf.mxu0
      %475 = vdwg.mxu0
      %v476 = vmul.f32 %v473, 0.35355338
      %v477 = vpack.c.bf16 %v476, %v476
      %v478 = vpack.c.bf16 %v473, %v473
      %480 = vrot.lane.b32.xlu0 %v478, 96
      %v481 = vpop.permute.xlu0 %480
      %vm482 = vcmask 64512
      %v484 = vsel %vm482, %v477, 0
      %v487 = vsel %vm482, %v481, 0
      %489 = vmatpush.bf16.xpose.msra.mxu0 0
      %490 = vmatpush.bf16.xpose.msra.mxu0 0
      %491 = vmatpush.bf16.xpose.msra.mxu0 0
      %492 = vmatpush.bf16.xpose.msra.mxu0 0
      %493 = vmatpush.bf16.xpose.msra.mxu0 0
      %494 = vmatpush.bf16.xpose.msra.mxu0 0
      %495 = vmatpush.bf16.xpose.msra.mxu0 0
      %496 = vmatpush.bf16.xpose.msra.mxu0 %v487
      %497 = vmatmul.bf16.gmra.mxu0 %v484
      %v498 = vpop.f32.mrf.mxu0
      %v499 = vadd.f32 0.0, %v498
      %v500 = vpop.f32.mrf.mxu0
      %501 = vdwg.mxu0
      %v502 = vsel %vm482, %v499, -inf
      %503 = vmax.xlane.f32.xlu0 %v502
      %v504 = vpop.xlane.xlu0 %503
      %v505 = vsub.f32 %v499, %v504
      %v506 = vmul.f32 %v505, 1.442695
      %v507 = vpow.pop %v506
      %v508 = vsel %vm482, %v507, 0.0
      %509 = vadd.xlane.f32.xlu0 %v508
      %v510 = vpop.xlane.xlu0 %509
      %v511 = vrcp.pop %v510
      %v512 = vmul.f32 %v507, %v511
      %v513 = vpack.c.bf16 %v512, %v512
      %514 = vrot.lane.b32.xlu0 %v478, 64
      %v515 = vpop.permute.xlu0 %514
      %v517 = vsel %vm482, %v513, 0
      %vm519 = vcmask 1043456
      %v521 = vsel %vm519, %v515, 0
      %523 = vmatpush.bf16.msra.mxu0 0
      %524 = vmatpush.bf16.msra.mxu0 0
      %525 = vmatpush.bf16.msra.mxu0 0
      %526 = vmatpush.bf16.msra.mxu0 0
      %527 = vmatpush.bf16.msra.mxu0 0
      %528 = vmatpush.bf16.msra.mxu0 0
      %529 = vmatpush.bf16.msra.mxu0 0
      %530 = vmatpush.bf16.msra.mxu0 %v521
      %531 = vmatmul.bf16.gmra.mxu0 %v517
      %v532 = vpop.f32.mrf.mxu0
      %v533 = vadd.f32 0.0, %v532
      %v534 = vpop.f32.mrf.mxu0
      %535 = vdwg.mxu0
      %536 = vst.msk [vmem:[#allocation2] sm:$0xff] %vm482, %v533
      %538 = vrot.lane.b32.xlu0 %v477, 120
      %v539 = vpop.permute.xlu0 %538
      %540 = vrot.lane.b32.xlu0 %v478, 88
      %v541 = vpop.permute.xlu0 %540
      %v543 = vsel %vm482, %v539, 0
      %v546 = vsel %vm482, %v541, 0
      %548 = vmatpush.bf16.xpose.msra.mxu0 0
      %549 = vmatpush.bf16.xpose.msra.mxu0 0
      %550 = vmatpush.bf16.xpose.msra.mxu0 0
      %551 = vmatpush.bf16.xpose.msra.mxu0 0
      %552 = vmatpush.bf16.xpose.msra.mxu0 0
      %553 = vmatpush.bf16.xpose.msra.mxu0 0
      %554 = vmatpush.bf16.xpose.msra.mxu0 0
      %555 = vmatpush.bf16.xpose.msra.mxu0 %v546
      %556 = vmatmul.bf16.gmra.mxu0 %v543
      %v557 = vpop.f32.mrf.mxu0
      %v558 = vadd.f32 0.0, %v557
      %v559 = vpop.f32.mrf.mxu0
      %560 = vdwg.mxu0
      %v561 = vsel %vm482, %v558, -inf
      %562 = vmax.xlane.f32.xlu0 %v561
      %v563 = vpop.xlane.xlu0 %562
      %v564 = vsub.f32 %v558, %v563
      %v565 = vmul.f32 %v564, 1.442695
      %v566 = vpow.pop %v565
      %v567 = vsel %vm482, %v566, 0.0
      %568 = vadd.xlane.f32.xlu0 %v567
      %v569 = vpop.xlane.xlu0 %568
      %v570 = vrcp.pop %v569
      %v571 = vmul.f32 %v566, %v570
      %v572 = vpack.c.bf16 %v571, %v571
      %573 = vrot.lane.b32.xlu0 %v478, 56
      %v574 = vpop.permute.xlu0 %573
      %v576 = vsel %vm482, %v572, 0
      %v579 = vsel %vm519, %v574, 0
      %581 = vmatpush.bf16.msra.mxu0 0
      %582 = vmatpush.bf16.msra.mxu0 0
      %583 = vmatpush.bf16.msra.mxu0 0
      %584 = vmatpush.bf16.msra.mxu0 0
      %585 = vmatpush.bf16.msra.mxu0 0
      %586 = vmatpush.bf16.msra.mxu0 0
      %587 = vmatpush.bf16.msra.mxu0 0
      %588 = vmatpush.bf16.msra.mxu0 %v579
      %589 = vmatmul.bf16.gmra.mxu0 %v576
      %v590 = vpop.f32.mrf.mxu0
      %v591 = vadd.f32 0.0, %v590
      %v592 = vpop.f32.mrf.mxu0
      %593 = vdwg.mxu0
      %595 = vrot.lane.b32.xlu0 %v591, 8
      %v596 = vpop.permute.xlu0 %595
      %vm598 = vcmask 130112
      %599 = vst.msk [vmem:[#allocation2] sm:$0xff] %vm598, %v596
      %600 = vrot.lane.b32.xlu0 %v477, 112
      %v601 = vpop.permute.xlu0 %600
      %602 = vrot.lane.b32.xlu0 %v478, 80
      %v603 = vpop.permute.xlu0 %602
      %v605 = vsel %vm482, %v601, 0
      %v608 = vsel %vm482, %v603, 0
      %610 = vmatpush.bf16.xpose.msra.mxu0 0
      %611 = vmatpush.bf16.xpose.msra.mxu0 0
      %612 = vmatpush.bf16.xpose.msra.mxu0 0
      %613 = vmatpush.bf16.xpose.msra.mxu0 0
      %614 = vmatpush.bf16.xpose.msra.mxu0 0
      %615 = vmatpush.bf16.xpose.msra.mxu0 0
      %616 = vmatpush.bf16.xpose.msra.mxu0 0
      %617 = vmatpush.bf16.xpose.msra.mxu0 %v608
      %618 = vmatmul.bf16.gmra.mxu0 %v605
      %v619 = vpop.f32.mrf.mxu0
      %v620 = vadd.f32 0.0, %v619
      %v621 = vpop.f32.mrf.mxu0
      %622 = vdwg.mxu0
      %v623 = vsel %vm482, %v620, -inf
      %624 = vmax.xlane.f32.xlu0 %v623
      %v625 = vpop.xlane.xlu0 %624
      %v626 = vsub.f32 %v620, %v625
      %v627 = vmul.f32 %v626, 1.442695
      %v628 = vpow.pop %v627
      %v629 = vsel %vm482, %v628, 0.0
      %630 = vadd.xlane.f32.xlu0 %v629
      %v631 = vpop.xlane.xlu0 %630
      %v632 = vrcp.pop %v631
      %v633 = vmul.f32 %v628, %v632
      %v634 = vpack.c.bf16 %v633, %v633
      %635 = vrot.lane.b32.xlu0 %v478, 48
      %v636 = vpop.permute.xlu0 %635
      %v638 = vsel %vm482, %v634, 0
      %v641 = vsel %vm519, %v636, 0
      %643 = vmatpush.bf16.msra.mxu0 0
      %644 = vmatpush.bf16.msra.mxu0 0
      %645 = vmatpush.bf16.msra.mxu0 0
      %646 = vmatpush.bf16.msra.mxu0 0
      %647 = vmatpush.bf16.msra.mxu0 0
      %648 = vmatpush.bf16.msra.mxu0 0
      %649 = vmatpush.bf16.msra.mxu0 0
      %650 = vmatpush.bf16.msra.mxu0 %v641
      %651 = vmatmul.bf16.gmra.mxu0 %v638
      %v652 = vpop.f32.mrf.mxu0
      %v653 = vadd.f32 0.0, %v652
      %v654 = vpop.f32.mrf.mxu0
      %655 = vdwg.mxu0
      %657 = vrot.lane.b32.xlu0 %v653, 16
      %v658 = vpop.permute.xlu0 %657
      %vm660 = vcmask 195712
      %661 = vst.msk [vmem:[#allocation2] sm:$0xff] %vm660, %v658
      %662 = vrot.lane.b32.xlu0 %v477, 104
      %v663 = vpop.permute.xlu0 %662
      %664 = vrot.lane.b32.xlu0 %v478, 72
      %v665 = vpop.permute.xlu0 %664
      %v667 = vsel %vm482, %v663, 0
      %v670 = vsel %vm482, %v665, 0
      %672 = vmatpush.bf16.xpose.msra.mxu0 0
      %673 = vmatpush.bf16.xpose.msra.mxu0 0
      %674 = vmatpush.bf16.xpose.msra.mxu0 0
      %675 = vmatpush.bf16.xpose.msra.mxu0 0
      %676 = vmatpush.bf16.xpose.msra.mxu0 0
      %677 = vmatpush.bf16.xpose.msra.mxu0 0
      %678 = vmatpush.bf16.xpose.msra.mxu0 0
      %679 = vmatpush.bf16.xpose.msra.mxu0 %v670
      %680 = vmatmul.bf16.gmra.mxu0 %v667
      %v681 = vpop.f32.mrf.mxu0
      %v682 = vadd.f32 0.0, %v681
      %v683 = vpop.f32.mrf.mxu0
      %684 = vdwg.mxu0
      %v685 = vsel %vm482, %v682, -inf
      %686 = vmax.xlane.f32.xlu0 %v685
      %v687 = vpop.xlane.xlu0 %686
      %v688 = vsub.f32 %v682, %v687
      %v689 = vmul.f32 %v688, 1.442695
      %v690 = vpow.pop %v689
      %v691 = vsel %vm482, %v690, 0.0
      %692 = vadd.xlane.f32.xlu0 %v691
      %v693 = vpop.xlane.xlu0 %692
      %v694 = vrcp.pop %v693
      %v695 = vmul.f32 %v690, %v694
      %v696 = vpack.c.bf16 %v695, %v695
      %697 = vrot.lane.b32.xlu0 %v478, 40
      %v698 = vpop.permute.xlu0 %697
      %v700 = vsel %vm482, %v696, 0
      %v703 = vsel %vm519, %v698, 0
      %705 = vmatpush.bf16.msra.mxu0 0
      %706 = vmatpush.bf16.msra.mxu0 0
      %707 = vmatpush.bf16.msra.mxu0 0
      %708 = vmatpush.bf16.msra.mxu0 0
      %709 = vmatpush.bf16.msra.mxu0 0
      %710 = vmatpush.bf16.msra.mxu0 0
      %711 = vmatpush.bf16.msra.mxu0 0
      %712 = vmatpush.bf16.msra.mxu0 %v703
      %713 = vmatmul.bf16.gmra.mxu0 %v700
      %v714 = vpop.f32.mrf.mxu0
      %v715 = vadd.f32 0.0, %v714
      %v716 = vpop.f32.mrf.mxu0
      %717 = vdwg.mxu0
      %719 = vrot.lane.b32.xlu0 %v715, 24
      %v720 = vpop.permute.xlu0 %719
      %vm722 = vcmask 261312
      %723 = vst.msk [vmem:[#allocation2] sm:$0xff] %vm722, %v720
      %v724 = vld [vmem:[#allocation2] sm:$0xff]
      %v725 = vpack.c.bf16 %v724, %v724
      %v726 = vld [vmem:[%s3] sm:$0xf]
      %v727 = vld [vmem:[%s3 + $0x4] sm:$0xf]
      %v728 = vld [vmem:[%s3 + $0x8] sm:$0xf]
      %v729 = vld [vmem:[%s3 + $0xc] sm:$0xf]
      %v730 = vld [vmem:[%s4] sm:$0x1]
      %v732 = vperm.slane %v730, 0
      %v738 = vunpack.c.l.b16 %v726
      %v739 = vunpack.c.l.b16 %v727
      %v740 = vunpack.c.l.b16 %v728
      %v741 = vunpack.c.l.b16 %v729
      %v742 = vpack.c.b16 %v739, %v738
      %v743 = vpack.c.b16 %v741, %v740
      %v747 = vsel %vm459, %v725, 0
      %749 = vmatpush.bf16.msra.mxu0 0
      %750 = vmatpush.bf16.msra.mxu0 0
      %751 = vmatpush.bf16.msra.mxu0 0
      %752 = vmatpush.bf16.msra.mxu0 0
      %753 = vmatpush.bf16.msra.mxu0 0
      %754 = vmatpush.bf16.msra.mxu0 0
      %755 = vmatpush.bf16.msra.mxu0 %v743
      %756 = vmatpush.bf16.msra.mxu0 %v742
      %757 = vmatmul.bf16.gmra.mxu0 %v747
      %v758 = vpop.f32.mrf.mxu0
      %v759 = vadd.f32 %v732, %v758
      %v760 = vpop.f32.mrf.mxu0
      %761 = vdwg.mxu0
      %v762 = vadd.f32 %v437, %v759
      %v763 = vld [vmem:[%s5] sm:$0x1]
      %v764 = vld [vmem:[%s6] sm:$0x1]
      %v765 = vsel %vm459, %v762, 0.0
      %766 = vadd.xlane.f32.xlu0 %v765
      %v767 = vpop.xlane.xlu0 %766
      %v768 = vrcp.pop 32.0
      %v769 = vmul.f32 32.0, %v768
      %v770 = vsub.f32 1.0, %v769
      %v771 = vmul.f32 %v768, %v770
      %v772 = vadd.f32 %v768, %v771
      %vm773 = vweird.f32 %v768
      %v774 = vsel %vm773, %v768, %v772
      %v775 = vmul.f32 %v767, %v774
      %v776 = vsub.f32 %v762, %v775
      %v777 = vmul.f32 %v776, %v776
      %v778 = vsel %vm459, %v777, 0.0
      %779 = vadd.xlane.f32.xlu0 %v778
      %v780 = vpop.xlane.xlu0 %779
      %v781 = vmul.f32 %v780, %v774
      %v782 = vadd.f32 %v781, 1e-05
      %v783 = vrsqrt.pop %v782
      %v784 = vmul.f32 %v783, %v782
      %v785 = vmul.f32 %v784, %v783
      %v786 = vmul.f32 0.5, %v785
      %v787 = vsub.f32 1.5, %v786
      %v788 = vmul.f32 %v783, %v787
      %vm789 = vweird.f32 %v782
      %vm790 = vweird.f32 %v783
      %vm791 = vmor %vm789, %vm790
      %v792 = vsel %vm791, %v783, %v788
      %v793 = vmul.f32 %v776, %v792
      %v795 = vperm.slane %v763, 0
      %v797 = vmul.f32 %v793, %v795
      %v799 = vperm.slane %v764, 0
      %v801 = vadd.f32 %v797, %v799
      %v802 = vpack.c.bf16 %v801, %v801
      %v803 = vld [vmem:[%s7] sm:$0xff]
      %v804 = vld [vmem:[%s7 + $0x8] sm:$0xff]
      %v805 = vld [vmem:[%s7 + $0x40] sm:$0xff]
      %v806 = vld [vmem:[%s7 + $0x48] sm:$0xff]
      %v807 = vld [vmem:[%s7 + $0x80] sm:$0xff]
      %v808 = vld [vmem:[%s7 + $0x88] sm:$0xff]
      %v809 = vld [vmem:[%s7 + $0xc0] sm:$0xff]
      %v810 = vld [vmem:[%s7 + $0xc8] sm:$0xff]
      %v811 = vld [vmem:[%s8] sm:$0xf]
      %v813 = vperm.slane %v811, 0
      %v814 = vperm.slane %v811, 1
      %v815 = vperm.slane %v811, 2
      %v816 = vperm.slane %v811, 3
      %v829 = vunpack.c.l.b16 %v803
      %v830 = vunpack.c.h.b16 %v803
      %v831 = vunpack.c.l.b16 %v804
      %v832 = vunpack.c.h.b16 %v804
      %v833 = vunpack.c.l.b16 %v805
      %v834 = vunpack.c.h.b16 %v805
      %v835 = vunpack.c.l.b16 %v806
      %v836 = vunpack.c.h.b16 %v806
      %v837 = vunpack.c.l.b16 %v807
      %v838 = vunpack.c.h.b16 %v807
      %v839 = vunpack.c.l.b16 %v808
      %v840 = vunpack.c.h.b16 %v808
      %v841 = vunpack.c.l.b16 %v809
      %v842 = vunpack.c.h.b16 %v809
      %v843 = vunpack.c.l.b16 %v810
      %v844 = vunpack.c.h.b16 %v810
      %v845 = vpack.c.b16 %v833, %v829
      %v846 = vpack.c.b16 %v834, %v830
      %v847 = vpack.c.b16 %v835, %v831
      %v848 = vpack.c.b16 %v836, %v832
      %v849 = vpack.c.b16 %v841, %v837
      %v850 = vpack.c.b16 %v842, %v838
      %v851 = vpack.c.b16 %v843, %v839
      %v852 = vpack.c.b16 %v844, %v840
      %v862 = vsel %vm459, %v802, 0
      %864 = vmatpush.bf16.msra.mxu0 0
      %865 = vmatpush.bf16.msra.mxu0 0
      %866 = vmatpush.bf16.msra.mxu0 0
      %867 = vmatpush.bf16.msra.mxu0 0
      %868 = vmatpush.bf16.msra.mxu0 0
      %869 = vmatpush.bf16.msra.mxu0 0
      %870 = vmatpush.bf16.msra.mxu0 %v849
      %871 = vmatpush.bf16.msra.mxu0 %v845
      %872 = vmatmul.bf16.gmra.mxu0 %v862
      %v873 = vpop.f32.mrf.mxu0
      %v874 = vadd.f32 %v813, %v873
      %v875 = vpop.f32.mrf.mxu0
      %876 = vdwg.mxu0
      %877 = vmatpush.bf16.msra.mxu0 0
      %878 = vmatpush.bf16.msra.mxu0 0
      %879 = vmatpush.bf16.msra.mxu0 0
      %880 = vmatpush.bf16.msra.mxu0 0
      %881 = vmatpush.bf16.msra.mxu0 0
      %882 = vmatpush.bf16.msra.mxu0 0
      %883 = vmatpush.bf16.msra.mxu0 %v850
      %884 = vmatpush.bf16.msra.mxu0 %v846
      %885 = vmatmul.bf16.gmra.mxu0 %v862
      %v886 = vpop.f32.mrf.mxu0
      %v887 = vadd.f32 %v814, %v886
      %v888 = vpop.f32.mrf.mxu0
      %889 = vdwg.mxu0
      %890 = vmatpush.bf16.msra.mxu0 0
      %891 = vmatpush.bf16.msra.mxu0 0
      %892 = vmatpush.bf16.msra.mxu0 0
      %893 = vmatpush.bf16.msra.mxu0 0
      %894 = vmatpush.bf16.msra.mxu0 0
      %895 = vmatpush.bf16.msra.mxu0 0
      %896 = vmatpush.bf16.msra.mxu0 %v851
      %897 = vmatpush.bf16.msra.mxu0 %v847
      %898 = vmatmul.bf16.gmra.mxu0 %v862
      %v899 = vpop.f32.mrf.mxu0
      %v900 = vadd.f32 %v815, %v899
      %v901 = vpop.f32.mrf.mxu0
      %902 = vdwg.mxu0
      %903 = vmatpush.bf16.msra.mxu0 0
      %904 = vmatpush.bf16.msra.mxu0 0
      %905 = vmatpush.bf16.msra.mxu0 0
      %906 = vmatpush.bf16.msra.mxu0 0
      %907 = vmatpush.bf16.msra.mxu0 0
      %908 = vmatpush.bf16.msra.mxu0 0
      %909 = vmatpush.bf16.msra.mxu0 %v852
      %910 = vmatpush.bf16.msra.mxu0 %v848
      %911 = vmatmul.bf16.gmra.mxu0 %v862
      %v912 = vpop.f32.mrf.mxu0
      %v913 = vadd.f32 %v816, %v912
      %v914 = vpop.f32.mrf.mxu0
      %915 = vdwg.mxu0
      %v916 = vmax.f32 %v874, 0.0
      %v917 = vmax.f32 %v887, 0.0
      %v918 = vmax.f32 %v900, 0.0
      %v919 = vmax.f32 %v913, 0.0
      %v920 = vpack.c.bf16 %v916, %v916
      %v921 = vpack.c.bf16 %v917, %v917
      %v922 = vpack.c.bf16 %v918, %v918
      %v923 = vpack.c.bf16 %v919, %v919
      %v924 = vld [vmem:[%s9] sm:$0xf]
      %v925 = vld [vmem:[%s9 + $0x4] sm:$0xf]
      %v926 = vld [vmem:[%s9 + $0x8] sm:$0xf]
      %v927 = vld [vmem:[%s9 + $0xc] sm:$0xf]
      %v928 = vld [vmem:[%s9 + $0x10] sm:$0xf]
      %v929 = vld [vmem:[%s9 + $0x14] sm:$0xf]
      %v930 = vld [vmem:[%s9 + $0x18] sm:$0xf]
      %v931 = vld [vmem:[%s9 + $0x1c] sm:$0xf]
      %v932 = vld [vmem:[%s9 + $0x20] sm:$0xf]
      %v933 = vld [vmem:[%s9 + $0x24] sm:$0xf]
      %v934 = vld [vmem:[%s9 + $0x28] sm:$0xf]
      %v935 = vld [vmem:[%s9 + $0x2c] sm:$0xf]
      %v936 = vld [vmem:[%s9 + $0x30] sm:$0xf]
      %v937 = vld [vmem:[%s9 + $0x34] sm:$0xf]
      %v938 = vld [vmem:[%s9 + $0x38] sm:$0xf]
      %v939 = vld [vmem:[%s9 + $0x3c] sm:$0xf]
      %v940 = vld [vmem:[%s9 + $0x40] sm:$0xf]
      %v941 = vld [vmem:[%s9 + $0x44] sm:$0xf]
      %v942 = vld [vmem:[%s9 + $0x48] sm:$0xf]
      %v943 = vld [vmem:[%s9 + $0x4c] sm:$0xf]
      %v944 = vld [vmem:[%s9 + $0x50] sm:$0xf]
      %v945 = vld [vmem:[%s9 + $0x54] sm:$0xf]
      %v946 = vld [vmem:[%s9 + $0x58] sm:$0xf]
      %v947 = vld [vmem:[%s9 + $0x5c] sm:$0xf]
      %v948 = vld [vmem:[%s9 + $0x60] sm:$0xf]
      %v949 = vld [vmem:[%s9 + $0x64] sm:$0xf]
      %v950 = vld [vmem:[%s9 + $0x68] sm:$0xf]
      %v951 = vld [vmem:[%s9 + $0x6c] sm:$0xf]
      %v952 = vld [vmem:[%s9 + $0x70] sm:$0xf]
      %v953 = vld [vmem:[%s9 + $0x74] sm:$0xf]
      %v954 = vld [vmem:[%s9 + $0x78] sm:$0xf]
      %v955 = vld [vmem:[%s9 + $0x7c] sm:$0xf]
      %v956 = vld [vmem:[%s9 + $0x80] sm:$0xf]
      %v957 = vld [vmem:[%s9 + $0x84] sm:$0xf]
      %v958 = vld [vmem:[%s9 + $0x88] sm:$0xf]
      %v959 = vld [vmem:[%s9 + $0x8c] sm:$0xf]
      %v960 = vld [vmem:[%s9 + $0x90] sm:$0xf]
      %v961 = vld [vmem:[%s9 + $0x94] sm:$0xf]
      %v962 = vld [vmem:[%s9 + $0x98] sm:$0xf]
      %v963 = vld [vmem:[%s9 + $0x9c] sm:$0xf]
      %v964 = vld [vmem:[%s9 + $0xa0] sm:$0xf]
      %v965 = vld [vmem:[%s9 + $0xa4] sm:$0xf]
      %v966 = vld [vmem:[%s9 + $0xa8] sm:$0xf]
      %v967 = vld [vmem:[%s9 + $0xac] sm:$0xf]
      %v968 = vld [vmem:[%s9 + $0xb0] sm:$0xf]
      %v969 = vld [vmem:[%s9 + $0xb4] sm:$0xf]
      %v970 = vld [vmem:[%s9 + $0xb8] sm:$0xf]
      %v971 = vld [vmem:[%s9 + $0xbc] sm:$0xf]
      %v972 = vld [vmem:[%s9 + $0xc0] sm:$0xf]
      %v973 = vld [vmem:[%s9 + $0xc4] sm:$0xf]
      %v974 = vld [vmem:[%s9 + $0xc8] sm:$0xf]
      %v975 = vld [vmem:[%s9 + $0xcc] sm:$0xf]
      %v976 = vld [vmem:[%s9 + $0xd0] sm:$0xf]
      %v977 = vld [vmem:[%s9 + $0xd4] sm:$0xf]
      %v978 = vld [vmem:[%s9 + $0xd8] sm:$0xf]
      %v979 = vld [vmem:[%s9 + $0xdc] sm:$0xf]
      %v980 = vld [vmem:[%s9 + $0xe0] sm:$0xf]
      %v981 = vld [vmem:[%s9 + $0xe4] sm:$0xf]
      %v982 = vld [vmem:[%s9 + $0xe8] sm:$0xf]
      %v983 = vld [vmem:[%s9 + $0xec] sm:$0xf]
      %v984 = vld [vmem:[%s9 + $0xf0] sm:$0xf]
      %v985 = vld [vmem:[%s9 + $0xf4] sm:$0xf]
      %v986 = vld [vmem:[%s9 + $0xf8] sm:$0xf]
      %v987 = vld [vmem:[%s9 + $0xfc] sm:$0xf]
      %v988 = vld [vmem:[%s7 + $0x10] sm:$0xff]
      %v989 = vld [vmem:[%s7 + $0x18] sm:$0xff]
      %v990 = vld [vmem:[%s7 + $0x50] sm:$0xff]
      %v991 = vld [vmem:[%s7 + $0x58] sm:$0xff]
      %v992 = vld [vmem:[%s7 + $0x90] sm:$0xff]
      %v993 = vld [vmem:[%s7 + $0x98] sm:$0xff]
      %v994 = vld [vmem:[%s7 + $0xd0] sm:$0xff]
      %v995 = vld [vmem:[%s7 + $0xd8] sm:$0xff]
      %v996 = vld [vmem:[%s8 + $0x4] sm:$0xf]
      %v998 = vperm.slane %v996, 0
      %v999 = vperm.slane %v996, 1
      %v1000 = vperm.slane %v996, 2
      %v1001 = vperm.slane %v996, 3
      %v1014 = vunpack.c.l.b16 %v988
      %v1015 = vunpack.c.h.b16 %v988
      %v1016 = vunpack.c.l.b16 %v989
      %v1017 = vunpack.c.h.b16 %v989
      %v1018 = vunpack.c.l.b16 %v990
      %v1019 = vunpack.c.h.b16 %v990
      %v1020 = vunpack.c.l.b16 %v991
      %v1021 = vunpack.c.h.b16 %v991
      %v1022 = vunpack.c.l.b16 %v992
      %v1023 = vunpack.c.h.b16 %v992
      %v1024 = vunpack.c.l.b16 %v993
      %v1025 = vunpack.c.h.b16 %v993
      %v1026 = vunpack.c.l.b16 %v994
      %v1027 = vunpack.c.h.b16 %v994
      %v1028 = vunpack.c.l.b16 %v995
      %v1029 = vunpack.c.h.b16 %v995
      %v1030 = vpack.c.b16 %v1018, %v1014
      %v1031 = vpack.c.b16 %v1019, %v1015
      %v1032 = vpack.c.b16 %v1020, %v1016
      %v1033 = vpack.c.b16 %v1021, %v1017
      %v1034 = vpack.c.b16 %v1026, %v1022
      %v1035 = vpack.c.b16 %v1027, %v1023
      %v1036 = vpack.c.b16 %v1028, %v1024
      %v1037 = vpack.c.b16 %v1029, %v1025
      %1046 = vmatpush.bf16.msra.mxu0 0
      %1047 = vmatpush.bf16.msra.mxu0 0
      %1048 = vmatpush.bf16.msra.mxu0 0
      %1049 = vmatpush.bf16.msra.mxu0 0
      %1050 = vmatpush.bf16.msra.mxu0 0
      %1051 = vmatpush.bf16.msra.mxu0 0
      %1052 = vmatpush.bf16.msra.mxu0 %v1034
      %1053 = vmatpush.bf16.msra.mxu0 %v1030
      %1054 = vmatmul.bf16.gmra.mxu0 %v862
      %v1055 = vpop.f32.mrf.mxu0
      %v1056 = vadd.f32 %v998, %v1055
      %v1057 = vpop.f32.mrf.mxu0
      %1058 = vdwg.mxu0
      %1059 = vmatpush.bf16.msra.mxu0 0
      %1060 = vmatpush.bf16.msra.mxu0 0
      %1061 = vmatpush.bf16.msra.mxu0 0
      %1062 = vmatpush.bf16.msra.mxu0 0
      %1063 = vmatpush.bf16.msra.mxu0 0
      %1064 = vmatpush.bf16.msra.mxu0 0
      %1065 = vmatpush.bf16.msra.mxu0 %v1035
      %1066 = vmatpush.bf16.msra.mxu0 %v1031
      %1067 = vmatmul.bf16.gmra.mxu0 %v862
      %v1068 = vpop.f32.mrf.mxu0
      %v1069 = vadd.f32 %v999, %v1068
      %v1070 = vpop.f32.mrf.mxu0
      %1071 = vdwg.mxu0
      %1072 = vmatpush.bf16.msra.mxu0 0
      %1073 = vmatpush.bf16.msra.mxu0 0
      %1074 = vmatpush.bf16.msra.mxu0 0
      %1075 = vmatpush.bf16.msra.mxu0 0
      %1076 = vmatpush.bf16.msra.mxu0 0
      %1077 = vmatpush.bf16.msra.mxu0 0
      %1078 = vmatpush.bf16.msra.mxu0 %v1036
      %1079 = vmatpush.bf16.msra.mxu0 %v1032
      %1080 = vmatmul.bf16.gmra.mxu0 %v862
      %v1081 = vpop.f32.mrf.mxu0
      %v1082 = vadd.f32 %v1000, %v1081
      %v1083 = vpop.f32.mrf.mxu0
      %1084 = vdwg.mxu0
      %1085 = vmatpush.bf16.msra.mxu0 0
      %1086 = vmatpush.bf16.msra.mxu0 0
      %1087 = vmatpush.bf16.msra.mxu0 0
      %1088 = vmatpush.bf16.msra.mxu0 0
      %1089 = vmatpush.bf16.msra.mxu0 0
      %1090 = vmatpush.bf16.msra.mxu0 0
      %1091 = vmatpush.bf16.msra.mxu0 %v1037
      %1092 = vmatpush.bf16.msra.mxu0 %v1033
      %1093 = vmatmul.bf16.gmra.mxu0 %v862
      %v1094 = vpop.f32.mrf.mxu0
      %v1095 = vadd.f32 %v1001, %v1094
      %v1096 = vpop.f32.mrf.mxu0
      %1097 = vdwg.mxu0
      %v1098 = vmax.f32 %v1056, 0.0
      %v1099 = vmax.f32 %v1069, 0.0
      %v1100 = vmax.f32 %v1082, 0.0
      %v1101 = vmax.f32 %v1095, 0.0
      %v1102 = vpack.c.bf16 %v1098, %v1098
      %v1103 = vpack.c.bf16 %v1099, %v1099
      %v1104 = vpack.c.bf16 %v1100, %v1100
      %v1105 = vpack.c.bf16 %v1101, %v1101
      %v1106 = vld [vmem:[%s9 + $0x100] sm:$0xf]
      %v1107 = vld [vmem:[%s9 + $0x104] sm:$0xf]
      %v1108 = vld [vmem:[%s9 + $0x108] sm:$0xf]
      %v1109 = vld [vmem:[%s9 + $0x10c] sm:$0xf]
      %v1110 = vld [vmem:[%s9 + $0x110] sm:$0xf]
      %v1111 = vld [vmem:[%s9 + $0x114] sm:$0xf]
      %v1112 = vld [vmem:[%s9 + $0x118] sm:$0xf]
      %v1113 = vld [vmem:[%s9 + $0x11c] sm:$0xf]
      %v1114 = vld [vmem:[%s9 + $0x120] sm:$0xf]
      %v1115 = vld [vmem:[%s9 + $0x124] sm:$0xf]
      %v1116 = vld [vmem:[%s9 + $0x128] sm:$0xf]
      %v1117 = vld [vmem:[%s9 + $0x12c] sm:$0xf]
      %v1118 = vld [vmem:[%s9 + $0x130] sm:$0xf]
      %v1119 = vld [vmem:[%s9 + $0x134] sm:$0xf]
      %v1120 = vld [vmem:[%s9 + $0x138] sm:$0xf]
      %v1121 = vld [vmem:[%s9 + $0x13c] sm:$0xf]
      %v1122 = vld [vmem:[%s9 + $0x140] sm:$0xf]
      %v1123 = vld [vmem:[%s9 + $0x144] sm:$0xf]
      %v1124 = vld [vmem:[%s9 + $0x148] sm:$0xf]
      %v1125 = vld [vmem:[%s9 + $0x14c] sm:$0xf]
      %v1126 = vld [vmem:[%s9 + $0x150] sm:$0xf]
      %v1127 = vld [vmem:[%s9 + $0x154] sm:$0xf]
      %v1128 = vld [vmem:[%s9 + $0x158] sm:$0xf]
      %v1129 = vld [vmem:[%s9 + $0x15c] sm:$0xf]
      %v1130 = vld [vmem:[%s9 + $0x160] sm:$0xf]
      %v1131 = vld [vmem:[%s9 + $0x164] sm:$0xf]
      %v1132 = vld [vmem:[%s9 + $0x168] sm:$0xf]
      %v1133 = vld [vmem:[%s9 + $0x16c] sm:$0xf]
      %v1134 = vld [vmem:[%s9 + $0x170] sm:$0xf]
      %v1135 = vld [vmem:[%s9 + $0x174] sm:$0xf]
      %v1136 = vld [vmem:[%s9 + $0x178] sm:$0xf]
      %v1137 = vld [vmem:[%s9 + $0x17c] sm:$0xf]
      %v1138 = vld [vmem:[%s9 + $0x180] sm:$0xf]
      %v1139 = vld [vmem:[%s9 + $0x184] sm:$0xf]
      %v1140 = vld [vmem:[%s9 + $0x188] sm:$0xf]
      %v1141 = vld [vmem:[%s9 + $0x18c] sm:$0xf]
      %v1142 = vld [vmem:[%s9 + $0x190] sm:$0xf]
      %v1143 = vld [vmem:[%s9 + $0x194] sm:$0xf]
      %v1144 = vld [vmem:[%s9 + $0x198] sm:$0xf]
      %v1145 = vld [vmem:[%s9 + $0x19c] sm:$0xf]
      %v1146 = vld [vmem:[%s9 + $0x1a0] sm:$0xf]
      %v1147 = vld [vmem:[%s9 + $0x1a4] sm:$0xf]
      %v1148 = vld [vmem:[%s9 + $0x1a8] sm:$0xf]
      %v1149 = vld [vmem:[%s9 + $0x1ac] sm:$0xf]
      %v1150 = vld [vmem:[%s9 + $0x1b0] sm:$0xf]
      %v1151 = vld [vmem:[%s9 + $0x1b4] sm:$0xf]
      %v1152 = vld [vmem:[%s9 + $0x1b8] sm:$0xf]
      %v1153 = vld [vmem:[%s9 + $0x1bc] sm:$0xf]
      %v1154 = vld [vmem:[%s9 + $0x1c0] sm:$0xf]
      %v1155 = vld [vmem:[%s9 + $0x1c4] sm:$0xf]
      %v1156 = vld [vmem:[%s9 + $0x1c8] sm:$0xf]
      %v1157 = vld [vmem:[%s9 + $0x1cc] sm:$0xf]
      %v1158 = vld [vmem:[%s9 + $0x1d0] sm:$0xf]
      %v1159 = vld [vmem:[%s9 + $0x1d4] sm:$0xf]
      %v1160 = vld [vmem:[%s9 + $0x1d8] sm:$0xf]
      %v1161 = vld [vmem:[%s9 + $0x1dc] sm:$0xf]
      %v1162 = vld [vmem:[%s9 + $0x1e0] sm:$0xf]
      %v1163 = vld [vmem:[%s9 + $0x1e4] sm:$0xf]
      %v1164 = vld [vmem:[%s9 + $0x1e8] sm:$0xf]
      %v1165 = vld [vmem:[%s9 + $0x1ec] sm:$0xf]
      %v1166 = vld [vmem:[%s9 + $0x1f0] sm:$0xf]
      %v1167 = vld [vmem:[%s9 + $0x1f4] sm:$0xf]
      %v1168 = vld [vmem:[%s9 + $0x1f8] sm:$0xf]
      %v1169 = vld [vmem:[%s9 + $0x1fc] sm:$0xf]
      %v1234 = vunpack.c.l.b16 %v1106
      %v1235 = vunpack.c.l.b16 %v1107
      %v1236 = vunpack.c.l.b16 %v1108
      %v1237 = vunpack.c.l.b16 %v1109
      %v1238 = vunpack.c.l.b16 %v1110
      %v1239 = vunpack.c.l.b16 %v1111
      %v1240 = vunpack.c.l.b16 %v1112
      %v1241 = vunpack.c.l.b16 %v1113
      %v1242 = vunpack.c.l.b16 %v1114
      %v1243 = vunpack.c.l.b16 %v1115
      %v1244 = vunpack.c.l.b16 %v1116
      %v1245 = vunpack.c.l.b16 %v1117
      %v1246 = vunpack.c.l.b16 %v1118
      %v1247 = vunpack.c.l.b16 %v1119
      %v1248 = vunpack.c.l.b16 %v1120
      %v1249 = vunpack.c.l.b16 %v1121
      %v1250 = vunpack.c.l.b16 %v1122
      %v1251 = vunpack.c.l.b16 %v1123
      %v1252 = vunpack.c.l.b16 %v1124
      %v1253 = vunpack.c.l.b16 %v1125
      %v1254 = vunpack.c.l.b16 %v1126
      %v1255 = vunpack.c.l.b16 %v1127
      %v1256 = vunpack.c.l.b16 %v1128
      %v1257 = vunpack.c.l.b16 %v1129
      %v1258 = vunpack.c.l.b16 %v1130
      %v1259 = vunpack.c.l.b16 %v1131
      %v1260 = vunpack.c.l.b16 %v1132
      %v1261 = vunpack.c.l.b16 %v1133
      %v1262 = vunpack.c.l.b16 %v1134
      %v1263 = vunpack.c.l.b16 %v1135
      %v1264 = vunpack.c.l.b16 %v1136
      %v1265 = vunpack.c.l.b16 %v1137
      %v1266 = vunpack.c.l.b16 %v1138
      %v1267 = vunpack.c.l.b16 %v1139
      %v1268 = vunpack.c.l.b16 %v1140
      %v1269 = vunpack.c.l.b16 %v1141
      %v1270 = vunpack.c.l.b16 %v1142
      %v1271 = vunpack.c.l.b16 %v1143
      %v1272 = vunpack.c.l.b16 %v1144
      %v1273 = vunpack.c.l.b16 %v1145
      %v1274 = vunpack.c.l.b16 %v1146
      %v1275 = vunpack.c.l.b16 %v1147
      %v1276 = vunpack.c.l.b16 %v1148
      %v1277 = vunpack.c.l.b16 %v1149
      %v1278 = vunpack.c.l.b16 %v1150
      %v1279 = vunpack.c.l.b16 %v1151
      %v1280 = vunpack.c.l.b16 %v1152
      %v1281 = vunpack.c.l.b16 %v1153
      %v1282 = vunpack.c.l.b16 %v1154
      %v1283 = vunpack.c.l.b16 %v1155
      %v1284 = vunpack.c.l.b16 %v1156
      %v1285 = vunpack.c.l.b16 %v1157
      %v1286 = vunpack.c.l.b16 %v1158
      %v1287 = vunpack.c.l.b16 %v1159
      %v1288 = vunpack.c.l.b16 %v1160
      %v1289 = vunpack.c.l.b16 %v1161
      %v1290 = vunpack.c.l.b16 %v1162
      %v1291 = vunpack.c.l.b16 %v1163
      %v1292 = vunpack.c.l.b16 %v1164
      %v1293 = vunpack.c.l.b16 %v1165
      %v1294 = vunpack.c.l.b16 %v1166
      %v1295 = vunpack.c.l.b16 %v1167
      %v1296 = vunpack.c.l.b16 %v1168
      %v1297 = vunpack.c.l.b16 %v1169
      %v1298 = vpack.c.b16 %v1235, %v1234
      %v1299 = vpack.c.b16 %v1237, %v1236
      %v1300 = vpack.c.b16 %v1239, %v1238
      %v1301 = vpack.c.b16 %v1241, %v1240
      %v1302 = vpack.c.b16 %v1243, %v1242
      %v1303 = vpack.c.b16 %v1245, %v1244
      %v1304 = vpack.c.b16 %v1247, %v1246
      %v1305 = vpack.c.b16 %v1249, %v1248
      %v1306 = vpack.c.b16 %v1251, %v1250
      %v1307 = vpack.c.b16 %v1253, %v1252
      %v1308 = vpack.c.b16 %v1255, %v1254
      %v1309 = vpack.c.b16 %v1257, %v1256
      %v1310 = vpack.c.b16 %v1259, %v1258
      %v1311 = vpack.c.b16 %v1261, %v1260
      %v1312 = vpack.c.b16 %v1263, %v1262
      %v1313 = vpack.c.b16 %v1265, %v1264
      %v1314 = vpack.c.b16 %v1267, %v1266
      %v1315 = vpack.c.b16 %v1269, %v1268
      %v1316 = vpack.c.b16 %v1271, %v1270
      %v1317 = vpack.c.b16 %v1273, %v1272
      %v1318 = vpack.c.b16 %v1275, %v1274
      %v1319 = vpack.c.b16 %v1277, %v1276
      %v1320 = vpack.c.b16 %v1279, %v1278
      %v1321 = vpack.c.b16 %v1281, %v1280
      %v1322 = vpack.c.b16 %v1283, %v1282
      %v1323 = vpack.c.b16 %v1285, %v1284
      %v1324 = vpack.c.b16 %v1287, %v1286
      %v1325 = vpack.c.b16 %v1289, %v1288
      %v1326 = vpack.c.b16 %v1291, %v1290
      %v1327 = vpack.c.b16 %v1293, %v1292
      %v1328 = vpack.c.b16 %v1295, %v1294
      %v1329 = vpack.c.b16 %v1297, %v1296
      %1362 = vmatpush.bf16.msra.mxu0 %v1305
      %1363 = vmatpush.bf16.msra.mxu0 %v1304
      %1364 = vmatpush.bf16.msra.mxu0 %v1303
      %1365 = vmatpush.bf16.msra.mxu0 %v1302
      %1366 = vmatpush.bf16.msra.mxu0 %v1301
      %1367 = vmatpush.bf16.msra.mxu0 %v1300
      %1368 = vmatpush.bf16.msra.mxu0 %v1299
      %1369 = vmatpush.bf16.msra.mxu0 %v1298
      %1370 = vmatmul.bf16.gmra.mxu0 %v1102
      %v1371 = vpop.f32.mrf.mxu0
      %v1372 = vadd.f32 0.0, %v1371
      %v1373 = vpop.f32.mrf.mxu0
      %1374 = vdwg.mxu0
      %1375 = vmatpush.bf16.msra.mxu0 %v1313
      %1376 = vmatpush.bf16.msra.mxu0 %v1312
      %1377 = vmatpush.bf16.msra.mxu0 %v1311
      %1378 = vmatpush.bf16.msra.mxu0 %v1310
      %1379 = vmatpush.bf16.msra.mxu0 %v1309
      %1380 = vmatpush.bf16.msra.mxu0 %v1308
      %1381 = vmatpush.bf16.msra.mxu0 %v1307
      %1382 = vmatpush.bf16.msra.mxu0 %v1306
      %1383 = vmatmul.bf16.gmra.mxu0 %v1103
      %v1384 = vpop.f32.mrf.mxu0
      %v1385 = vadd.f32 %v1372, %v1384
      %v1386 = vpop.f32.mrf.mxu0
      %1387 = vdwg.mxu0
      %1388 = vmatpush.bf16.msra.mxu0 %v1321
      %1389 = vmatpush.bf16.msra.mxu0 %v1320
      %1390 = vmatpush.bf16.msra.mxu0 %v1319
      %1391 = vmatpush.bf16.msra.mxu0 %v1318
      %1392 = vmatpush.bf16.msra.mxu0 %v1317
      %1393 = vmatpush.bf16.msra.mxu0 %v1316
      %1394 = vmatpush.bf16.msra.mxu0 %v1315
      %1395 = vmatpush.bf16.msra.mxu0 %v1314
      %1396 = vmatmul.bf16.gmra.mxu0 %v1104
      %v1397 = vpop.f32.mrf.mxu0
      %v1398 = vadd.f32 %v1385, %v1397
      %v1399 = vpop.f32.mrf.mxu0
      %1400 = vdwg.mxu0
      %1401 = vmatpush.bf16.msra.mxu0 %v1329
      %1402 = vmatpush.bf16.msra.mxu0 %v1328
      %1403 = vmatpush.bf16.msra.mxu0 %v1327
      %1404 = vmatpush.bf16.msra.mxu0 %v1326
      %1405 = vmatpush.bf16.msra.mxu0 %v1325
      %1406 = vmatpush.bf16.msra.mxu0 %v1324
      %1407 = vmatpush.bf16.msra.mxu0 %v1323
      %1408 = vmatpush.bf16.msra.mxu0 %v1322
      %1409 = vmatmul.bf16.gmra.mxu0 %v1105
      %v1410 = vpop.f32.mrf.mxu0
      %v1411 = vadd.f32 %v1398, %v1410
      %v1412 = vpop.f32.mrf.mxu0
      %1413 = vdwg.mxu0
      %v1478 = vunpack.c.l.b16 %v924
      %v1479 = vunpack.c.l.b16 %v925
      %v1480 = vunpack.c.l.b16 %v926
      %v1481 = vunpack.c.l.b16 %v927
      %v1482 = vunpack.c.l.b16 %v928
      %v1483 = vunpack.c.l.b16 %v929
      %v1484 = vunpack.c.l.b16 %v930
      %v1485 = vunpack.c.l.b16 %v931
      %v1486 = vunpack.c.l.b16 %v932
      %v1487 = vunpack.c.l.b16 %v933
      %v1488 = vunpack.c.l.b16 %v934
      %v1489 = vunpack.c.l.b16 %v935
      %v1490 = vunpack.c.l.b16 %v936
      %v1491 = vunpack.c.l.b16 %v937
      %v1492 = vunpack.c.l.b16 %v938
      %v1493 = vunpack.c.l.b16 %v939
      %v1494 = vunpack.c.l.b16 %v940
      %v1495 = vunpack.c.l.b16 %v941
      %v1496 = vunpack.c.l.b16 %v942
      %v1497 = vunpack.c.l.b16 %v943
      %v1498 = vunpack.c.l.b16 %v944
      %v1499 = vunpack.c.l.b16 %v945
      %v1500 = vunpack.c.l.b16 %v946
      %v1501 = vunpack.c.l.b16 %v947
      %v1502 = vunpack.c.l.b16 %v948
      %v1503 = vunpack.c.l.b16 %v949
      %v1504 = vunpack.c.l.b16 %v950
      %v1505 = vunpack.c.l.b16 %v951
      %v1506 = vunpack.c.l.b16 %v952
      %v1507 = vunpack.c.l.b16 %v953
      %v1508 = vunpack.c.l.b16 %v954
      %v1509 = vunpack.c.l.b16 %v955
      %v1510 = vunpack.c.l.b16 %v956
      %v1511 = vunpack.c.l.b16 %v957
      %v1512 = vunpack.c.l.b16 %v958
      %v1513 = vunpack.c.l.b16 %v959
      %v1514 = vunpack.c.l.b16 %v960
      %v1515 = vunpack.c.l.b16 %v961
      %v1516 = vunpack.c.l.b16 %v962
      %v1517 = vunpack.c.l.b16 %v963
      %v1518 = vunpack.c.l.b16 %v964
      %v1519 = vunpack.c.l.b16 %v965
      %v1520 = vunpack.c.l.b16 %v966
      %v1521 = vunpack.c.l.b16 %v967
      %v1522 = vunpack.c.l.b16 %v968
      %v1523 = vunpack.c.l.b16 %v969
      %v1524 = vunpack.c.l.b16 %v970
      %v1525 = vunpack.c.l.b16 %v971
      %v1526 = vunpack.c.l.b16 %v972
      %v1527 = vunpack.c.l.b16 %v973
      %v1528 = vunpack.c.l.b16 %v974
      %v1529 = vunpack.c.l.b16 %v975
      %v1530 = vunpack.c.l.b16 %v976
      %v1531 = vunpack.c.l.b16 %v977
      %v1532 = vunpack.c.l.b16 %v978
      %v1533 = vunpack.c.l.b16 %v979
      %v1534 = vunpack.c.l.b16 %v980
      %v1535 = vunpack.c.l.b16 %v981
      %v1536 = vunpack.c.l.b16 %v982
      %v1537 = vunpack.c.l.b16 %v983
      %v1538 = vunpack.c.l.b16 %v984
      %v1539 = vunpack.c.l.b16 %v985
      %v1540 = vunpack.c.l.b16 %v986
      %v1541 = vunpack.c.l.b16 %v987
      %v1542 = vpack.c.b16 %v1479, %v1478
      %v1543 = vpack.c.b16 %v1481, %v1480
      %v1544 = vpack.c.b16 %v1483, %v1482
      %v1545 = vpack.c.b16 %v1485, %v1484
      %v1546 = vpack.c.b16 %v1487, %v1486
      %v1547 = vpack.c.b16 %v1489, %v1488
      %v1548 = vpack.c.b16 %v1491, %v1490
      %v1549 = vpack.c.b16 %v1493, %v1492
      %v1550 = vpack.c.b16 %v1495, %v1494
      %v1551 = vpack.c.b16 %v1497, %v1496
      %v1552 = vpack.c.b16 %v1499, %v1498
      %v1553 = vpack.c.b16 %v1501, %v1500
      %v1554 = vpack.c.b16 %v1503, %v1502
      %v1555 = vpack.c.b16 %v1505, %v1504
      %v1556 = vpack.c.b16 %v1507, %v1506
      %v1557 = vpack.c.b16 %v1509, %v1508
      %v1558 = vpack.c.b16 %v1511, %v1510
      %v1559 = vpack.c.b16 %v1513, %v1512
      %v1560 = vpack.c.b16 %v1515, %v1514
      %v1561 = vpack.c.b16 %v1517, %v1516
      %v1562 = vpack.c.b16 %v1519, %v1518
      %v1563 = vpack.c.b16 %v1521, %v1520
      %v1564 = vpack.c.b16 %v1523, %v1522
      %v1565 = vpack.c.b16 %v1525, %v1524
      %v1566 = vpack.c.b16 %v1527, %v1526
      %v1567 = vpack.c.b16 %v1529, %v1528
      %v1568 = vpack.c.b16 %v1531, %v1530
      %v1569 = vpack.c.b16 %v1533, %v1532
      %v1570 = vpack.c.b16 %v1535, %v1534
      %v1571 = vpack.c.b16 %v1537, %v1536
      %v1572 = vpack.c.b16 %v1539, %v1538
      %v1573 = vpack.c.b16 %v1541, %v1540
      %1606 = vmatpush.bf16.msra.mxu0 %v1549
      %1607 = vmatpush.bf16.msra.mxu0 %v1548
      %1608 = vmatpush.bf16.msra.mxu0 %v1547
      %1609 = vmatpush.bf16.msra.mxu0 %v1546
      %1610 = vmatpush.bf16.msra.mxu0 %v1545
      %1611 = vmatpush.bf16.msra.mxu0 %v1544
      %1612 = vmatpush.bf16.msra.mxu0 %v1543
      %1613 = vmatpush.bf16.msra.mxu0 %v1542
      %1614 = vmatmul.bf16.gmra.mxu0 %v920
      %v1615 = vpop.f32.mrf.mxu0
      %v1616 = vadd.f32 %v1411, %v1615
      %v1617 = vpop.f32.mrf.mxu0
      %1618 = vdwg.mxu0
      %1619 = vmatpush.bf16.msra.mxu0 %v1557
      %1620 = vmatpush.bf16.msra.mxu0 %v1556
      %1621 = vmatpush.bf16.msra.mxu0 %v1555
      %1622 = vmatpush.bf16.msra.mxu0 %v1554
      %1623 = vmatpush.bf16.msra.mxu0 %v1553
      %1624 = vmatpush.bf16.msra.mxu0 %v1552
      %1625 = vmatpush.bf16.msra.mxu0 %v1551
      %1626 = vmatpush.bf16.msra.mxu0 %v1550
      %1627 = vmatmul.bf16.gmra.mxu0 %v921
      %v1628 = vpop.f32.mrf.mxu0
      %v1629 = vadd.f32 %v1616, %v1628
      %v1630 = vpop.f32.mrf.mxu0
      %1631 = vdwg.mxu0
      %1632 = vmatpush.bf16.msra.mxu0 %v1565
      %1633 = vmatpush.bf16.msra.mxu0 %v1564
      %1634 = vmatpush.bf16.msra.mxu0 %v1563
      %1635 = vmatpush.bf16.msra.mxu0 %v1562
      %1636 = vmatpush.bf16.msra.mxu0 %v1561
      %1637 = vmatpush.bf16.msra.mxu0 %v1560
      %1638 = vmatpush.bf16.msra.mxu0 %v1559
      %1639 = vmatpush.bf16.msra.mxu0 %v1558
      %1640 = vmatmul.bf16.gmra.mxu0 %v922
      %v1641 = vpop.f32.mrf.mxu0
      %v1642 = vadd.f32 %v1629, %v1641
      %v1643 = vpop.f32.mrf.mxu0
      %1644 = vdwg.mxu0
      %1645 = vmatpush.bf16.msra.mxu0 %v1573
      %1646 = vmatpush.bf16.msra.mxu0 %v1572
      %1647 = vmatpush.bf16.msra.mxu0 %v1571
      %1648 = vmatpush.bf16.msra.mxu0 %v1570
      %1649 = vmatpush.bf16.msra.mxu0 %v1569
      %1650 = vmatpush.bf16.msra.mxu0 %v1568
      %1651 = vmatpush.bf16.msra.mxu0 %v1567
      %1652 = vmatpush.bf16.msra.mxu0 %v1566
      %1653 = vmatmul.bf16.gmra.mxu0 %v923
      %v1654 = vpop.f32.mrf.mxu0
      %v1655 = vadd.f32 %v1642, %v1654
      %v1656 = vpop.f32.mrf.mxu0
      %1657 = vdwg.mxu0
      %v1658 = vld [vmem:[%s7 + $0x20] sm:$0xff]
      %v1659 = vld [vmem:[%s7 + $0x28] sm:$0xff]
      %v1660 = vld [vmem:[%s7 + $0x60] sm:$0xff]
      %v1661 = vld [vmem:[%s7 + $0x68] sm:$0xff]
      %v1662 = vld [vmem:[%s7 + $0xa0] sm:$0xff]
      %v1663 = vld [vmem:[%s7 + $0xa8] sm:$0xff]
      %v1664 = vld [vmem:[%s7 + $0xe0] sm:$0xff]
      %v1665 = vld [vmem:[%s7 + $0xe8] sm:$0xff]
      %v1666 = vld [vmem:[%s8 + $0x8] sm:$0xf]
      %v1668 = vperm.slane %v1666, 0
      %v1669 = vperm.slane %v1666, 1
      %v1670 = vperm.slane %v1666, 2
      %v1671 = vperm.slane %v1666, 3
      %v1684 = vunpack.c.l.b16 %v1658
      %v1685 = vunpack.c.h.b16 %v1658
      %v1686 = vunpack.c.l.b16 %v1659
      %v1687 = vunpack.c.h.b16 %v1659
      %v1688 = vunpack.c.l.b16 %v1660
      %v1689 = vunpack.c.h.b16 %v1660
      %v1690 = vunpack.c.l.b16 %v1661
      %v1691 = vunpack.c.h.b16 %v1661
      %v1692 = vunpack.c.l.b16 %v1662
      %v1693 = vunpack.c.h.b16 %v1662
      %v1694 = vunpack.c.l.b16 %v1663
      %v1695 = vunpack.c.h.b16 %v1663
      %v1696 = vunpack.c.l.b16 %v1664
      %v1697 = vunpack.c.h.b16 %v1664
      %v1698 = vunpack.c.l.b16 %v1665
      %v1699 = vunpack.c.h.b16 %v1665
      %v1700 = vpack.c.b16 %v1688, %v1684
      %v1701 = vpack.c.b16 %v1689, %v1685
      %v1702 = vpack.c.b16 %v1690, %v1686
      %v1703 = vpack.c.b16 %v1691, %v1687
      %v1704 = vpack.c.b16 %v1696, %v1692
      %v1705 = vpack.c.b16 %v1697, %v1693
      %v1706 = vpack.c.b16 %v1698, %v1694
      %v1707 = vpack.c.b16 %v1699, %v1695
      %1716 = vmatpush.bf16.msra.mxu0 0
      %1717 = vmatpush.bf16.msra.mxu0 0
      %1718 = vmatpush.bf16.msra.mxu0 0
      %1719 = vmatpush.bf16.msra.mxu0 0
      %1720 = vmatpush.bf16.msra.mxu0 0
      %1721 = vmatpush.bf16.msra.mxu0 0
      %1722 = vmatpush.bf16.msra.mxu0 %v1704
      %1723 = vmatpush.bf16.msra.mxu0 %v1700
      %1724 = vmatmul.bf16.gmra.mxu0 %v862
      %v1725 = vpop.f32.mrf.mxu0
      %v1726 = vadd.f32 %v1668, %v1725
      %v1727 = vpop.f32.mrf.mxu0
      %1728 = vdwg.mxu0
      %1729 = vmatpush.bf16.msra.mxu0 0
      %1730 = vmatpush.bf16.msra.mxu0 0
      %1731 = vmatpush.bf16.msra.mxu0 0
      %1732 = vmatpush.bf16.msra.mxu0 0
      %1733 = vmatpush.bf16.msra.mxu0 0
      %1734 = vmatpush.bf16.msra.mxu0 0
      %1735 = vmatpush.bf16.msra.mxu0 %v1705
      %1736 = vmatpush.bf16.msra.mxu0 %v1701
      %1737 = vmatmul.bf16.gmra.mxu0 %v862
      %v1738 = vpop.f32.mrf.mxu0
      %v1739 = vadd.f32 %v1669, %v1738
      %v1740 = vpop.f32.mrf.mxu0
      %1741 = vdwg.mxu0
      %1742 = vmatpush.bf16.msra.mxu0 0
      %1743 = vmatpush.bf16.msra.mxu0 0
      %1744 = vmatpush.bf16.msra.mxu0 0
      %1745 = vmatpush.bf16.msra.mxu0 0
      %1746 = vmatpush.bf16.msra.mxu0 0
      %1747 = vmatpush.bf16.msra.mxu0 0
      %1748 = vmatpush.bf16.msra.mxu0 %v1706
      %1749 = vmatpush.bf16.msra.mxu0 %v1702
      %1750 = vmatmul.bf16.gmra.mxu0 %v862
      %v1751 = vpop.f32.mrf.mxu0
      %v1752 = vadd.f32 %v1670, %v1751
      %v1753 = vpop.f32.mrf.mxu0
      %1754 = vdwg.mxu0
      %1755 = vmatpush.bf16.msra.mxu0 0
      %1756 = vmatpush.bf16.msra.mxu0 0
      %1757 = vmatpush.bf16.msra.mxu0 0
      %1758 = vmatpush.bf16.msra.mxu0 0
      %1759 = vmatpush.bf16.msra.mxu0 0
      %1760 = vmatpush.bf16.msra.mxu0 0
      %1761 = vmatpush.bf16.msra.mxu0 %v1707
      %1762 = vmatpush.bf16.msra.mxu0 %v1703
      %1763 = vmatmul.bf16.gmra.mxu0 %v862
      %v1764 = vpop.f32.mrf.mxu0
      %v1765 = vadd.f32 %v1671, %v1764
      %v1766 = vpop.f32.mrf.mxu0
      %1767 = vdwg.mxu0
      %v1768 = vmax.f32 %v1726, 0.0
      %v1769 = vmax.f32 %v1739, 0.0
      %v1770 = vmax.f32 %v1752, 0.0
      %v1771 = vmax.f32 %v1765, 0.0
      %v1772 = vpack.c.bf16 %v1768, %v1768
      %v1773 = vpack.c.bf16 %v1769, %v1769
      %v1774 = vpack.c.bf16 %v1770, %v1770
      %v1775 = vpack.c.bf16 %v1771, %v1771
      %v1776 = vld [vmem:[%s9 + $0x200] sm:$0xf]
      %v1777 = vld [vmem:[%s9 + $0x204] sm:$0xf]
      %v1778 = vld [vmem:[%s9 + $0x208] sm:$0xf]
      %v1779 = vld [vmem:[%s9 + $0x20c] sm:$0xf]
      %v1780 = vld [vmem:[%s9 + $0x210] sm:$0xf]
      %v1781 = vld [vmem:[%s9 + $0x214] sm:$0xf]
      %v1782 = vld [vmem:[%s9 + $0x218] sm:$0xf]
      %v1783 = vld [vmem:[%s9 + $0x21c] sm:$0xf]
      %v1784 = vld [vmem:[%s9 + $0x220] sm:$0xf]
      %v1785 = vld [vmem:[%s9 + $0x224] sm:$0xf]
      %v1786 = vld [vmem:[%s9 + $0x228] sm:$0xf]
      %v1787 = vld [vmem:[%s9 + $0x22c] sm:$0xf]
      %v1788 = vld [vmem:[%s9 + $0x230] sm:$0xf]
      %v1789 = vld [vmem:[%s9 + $0x234] sm:$0xf]
      %v1790 = vld [vmem:[%s9 + $0x238] sm:$0xf]
      %v1791 = vld [vmem:[%s9 + $0x23c] sm:$0xf]
      %v1792 = vld [vmem:[%s9 + $0x240] sm:$0xf]
      %v1793 = vld [vmem:[%s9 + $0x244] sm:$0xf]
      %v1794 = vld [vmem:[%s9 + $0x248] sm:$0xf]
      %v1795 = vld [vmem:[%s9 + $0x24c] sm:$0xf]
      %v1796 = vld [vmem:[%s9 + $0x250] sm:$0xf]
      %v1797 = vld [vmem:[%s9 + $0x254] sm:$0xf]
      %v1798 = vld [vmem:[%s9 + $0x258] sm:$0xf]
      %v1799 = vld [vmem:[%s9 + $0x25c] sm:$0xf]
      %v1800 = vld [vmem:[%s9 + $0x260] sm:$0xf]
      %v1801 = vld [vmem:[%s9 + $0x264] sm:$0xf]
      %v1802 = vld [vmem:[%s9 + $0x268] sm:$0xf]
      %v1803 = vld [vmem:[%s9 + $0x26c] sm:$0xf]
      %v1804 = vld [vmem:[%s9 + $0x270] sm:$0xf]
      %v1805 = vld [vmem:[%s9 + $0x274] sm:$0xf]
      %v1806 = vld [vmem:[%s9 + $0x278] sm:$0xf]
      %v1807 = vld [vmem:[%s9 + $0x27c] sm:$0xf]
      %v1808 = vld [vmem:[%s9 + $0x280] sm:$0xf]
      %v1809 = vld [vmem:[%s9 + $0x284] sm:$0xf]
      %v1810 = vld [vmem:[%s9 + $0x288] sm:$0xf]
      %v1811 = vld [vmem:[%s9 + $0x28c] sm:$0xf]
      %v1812 = vld [vmem:[%s9 + $0x290] sm:$0xf]
      %v1813 = vld [vmem:[%s9 + $0x294] sm:$0xf]
      %v1814 = vld [vmem:[%s9 + $0x298] sm:$0xf]
      %v1815 = vld [vmem:[%s9 + $0x29c] sm:$0xf]
      %v1816 = vld [vmem:[%s9 + $0x2a0] sm:$0xf]
      %v1817 = vld [vmem:[%s9 + $0x2a4] sm:$0xf]
      %v1818 = vld [vmem:[%s9 + $0x2a8] sm:$0xf]
      %v1819 = vld [vmem:[%s9 + $0x2ac] sm:$0xf]
      %v1820 = vld [vmem:[%s9 + $0x2b0] sm:$0xf]
      %v1821 = vld [vmem:[%s9 + $0x2b4] sm:$0xf]
      %v1822 = vld [vmem:[%s9 + $0x2b8] sm:$0xf]
      %v1823 = vld [vmem:[%s9 + $0x2bc] sm:$0xf]
      %v1824 = vld [vmem:[%s9 + $0x2c0] sm:$0xf]
      %v1825 = vld [vmem:[%s9 + $0x2c4] sm:$0xf]
      %v1826 = vld [vmem:[%s9 + $0x2c8] sm:$0xf]
      %v1827 = vld [vmem:[%s9 + $0x2cc] sm:$0xf]
      %v1828 = vld [vmem:[%s9 + $0x2d0] sm:$0xf]
      %v1829 = vld [vmem:[%s9 + $0x2d4] sm:$0xf]
      %v1830 = vld [vmem:[%s9 + $0x2d8] sm:$0xf]
      %v1831 = vld [vmem:[%s9 + $0x2dc] sm:$0xf]
      %v1832 = vld [vmem:[%s9 + $0x2e0] sm:$0xf]
      %v1833 = vld [vmem:[%s9 + $0x2e4] sm:$0xf]
      %v1834 = vld [vmem:[%s9 + $0x2e8] sm:$0xf]
      %v1835 = vld [vmem:[%s9 + $0x2ec] sm:$0xf]
      %v1836 = vld [vmem:[%s9 + $0x2f0] sm:$0xf]
      %v1837 = vld [vmem:[%s9 + $0x2f4] sm:$0xf]
      %v1838 = vld [vmem:[%s9 + $0x2f8] sm:$0xf]
      %v1839 = vld [vmem:[%s9 + $0x2fc] sm:$0xf]
      %v1904 = vunpack.c.l.b16 %v1776
      %v1905 = vunpack.c.l.b16 %v1777
      %v1906 = vunpack.c.l.b16 %v1778
      %v1907 = vunpack.c.l.b16 %v1779
      %v1908 = vunpack.c.l.b16 %v1780
      %v1909 = vunpack.c.l.b16 %v1781
      %v1910 = vunpack.c.l.b16 %v1782
      %v1911 = vunpack.c.l.b16 %v1783
      %v1912 = vunpack.c.l.b16 %v1784
      %v1913 = vunpack.c.l.b16 %v1785
      %v1914 = vunpack.c.l.b16 %v1786
      %v1915 = vunpack.c.l.b16 %v1787
      %v1916 = vunpack.c.l.b16 %v1788
      %v1917 = vunpack.c.l.b16 %v1789
      %v1918 = vunpack.c.l.b16 %v1790
      %v1919 = vunpack.c.l.b16 %v1791
      %v1920 = vunpack.c.l.b16 %v1792
      %v1921 = vunpack.c.l.b16 %v1793
      %v1922 = vunpack.c.l.b16 %v1794
      %v1923 = vunpack.c.l.b16 %v1795
      %v1924 = vunpack.c.l.b16 %v1796
      %v1925 = vunpack.c.l.b16 %v1797
      %v1926 = vunpack.c.l.b16 %v1798
      %v1927 = vunpack.c.l.b16 %v1799
      %v1928 = vunpack.c.l.b16 %v1800
      %v1929 = vunpack.c.l.b16 %v1801
      %v1930 = vunpack.c.l.b16 %v1802
      %v1931 = vunpack.c.l.b16 %v1803
      %v1932 = vunpack.c.l.b16 %v1804
      %v1933 = vunpack.c.l.b16 %v1805
      %v1934 = vunpack.c.l.b16 %v1806
      %v1935 = vunpack.c.l.b16 %v1807
      %v1936 = vunpack.c.l.b16 %v1808
      %v1937 = vunpack.c.l.b16 %v1809
      %v1938 = vunpack.c.l.b16 %v1810
      %v1939 = vunpack.c.l.b16 %v1811
      %v1940 = vunpack.c.l.b16 %v1812
      %v1941 = vunpack.c.l.b16 %v1813
      %v1942 = vunpack.c.l.b16 %v1814
      %v1943 = vunpack.c.l.b16 %v1815
      %v1944 = vunpack.c.l.b16 %v1816
      %v1945 = vunpack.c.l.b16 %v1817
      %v1946 = vunpack.c.l.b16 %v1818
      %v1947 = vunpack.c.l.b16 %v1819
      %v1948 = vunpack.c.l.b16 %v1820
      %v1949 = vunpack.c.l.b16 %v1821
      %v1950 = vunpack.c.l.b16 %v1822
      %v1951 = vunpack.c.l.b16 %v1823
      %v1952 = vunpack.c.l.b16 %v1824
      %v1953 = vunpack.c.l.b16 %v1825
      %v1954 = vunpack.c.l.b16 %v1826
      %v1955 = vunpack.c.l.b16 %v1827
      %v1956 = vunpack.c.l.b16 %v1828
      %v1957 = vunpack.c.l.b16 %v1829
      %v1958 = vunpack.c.l.b16 %v1830
      %v1959 = vunpack.c.l.b16 %v1831
      %v1960 = vunpack.c.l.b16 %v1832
      %v1961 = vunpack.c.l.b16 %v1833
      %v1962 = vunpack.c.l.b16 %v1834
      %v1963 = vunpack.c.l.b16 %v1835
      %v1964 = vunpack.c.l.b16 %v1836
      %v1965 = vunpack.c.l.b16 %v1837
      %v1966 = vunpack.c.l.b16 %v1838
      %v1967 = vunpack.c.l.b16 %v1839
      %v1968 = vpack.c.b16 %v1905, %v1904
      %v1969 = vpack.c.b16 %v1907, %v1906
      %v1970 = vpack.c.b16 %v1909, %v1908
      %v1971 = vpack.c.b16 %v1911, %v1910
      %v1972 = vpack.c.b16 %v1913, %v1912
      %v1973 = vpack.c.b16 %v1915, %v1914
      %v1974 = vpack.c.b16 %v1917, %v1916
      %v1975 = vpack.c.b16 %v1919, %v1918
      %v1976 = vpack.c.b16 %v1921, %v1920
      %v1977 = vpack.c.b16 %v1923, %v1922
      %v1978 = vpack.c.b16 %v1925, %v1924
      %v1979 = vpack.c.b16 %v1927, %v1926
      %v1980 = vpack.c.b16 %v1929, %v1928
      %v1981 = vpack.c.b16 %v1931, %v1930
      %v1982 = vpack.c.b16 %v1933, %v1932
      %v1983 = vpack.c.b16 %v1935, %v1934
      %v1984 = vpack.c.b16 %v1937, %v1936
      %v1985 = vpack.c.b16 %v1939, %v1938
      %v1986 = vpack.c.b16 %v1941, %v1940
      %v1987 = vpack.c.b16 %v1943, %v1942
      %v1988 = vpack.c.b16 %v1945, %v1944
      %v1989 = vpack.c.b16 %v1947, %v1946
      %v1990 = vpack.c.b16 %v1949, %v1948
      %v1991 = vpack.c.b16 %v1951, %v1950
      %v1992 = vpack.c.b16 %v1953, %v1952
      %v1993 = vpack.c.b16 %v1955, %v1954
      %v1994 = vpack.c.b16 %v1957, %v1956
      %v1995 = vpack.c.b16 %v1959, %v1958
      %v1996 = vpack.c.b16 %v1961, %v1960
      %v1997 = vpack.c.b16 %v1963, %v1962
      %v1998 = vpack.c.b16 %v1965, %v1964
      %v1999 = vpack.c.b16 %v1967, %v1966
      %2032 = vmatpush.bf16.msra.mxu0 %v1975
      %2033 = vmatpush.bf16.msra.mxu0 %v1974
      %2034 = vmatpush.bf16.msra.mxu0 %v1973
      %2035 = vmatpush.bf16.msra.mxu0 %v1972
      %2036 = vmatpush.bf16.msra.mxu0 %v1971
      %2037 = vmatpush.bf16.msra.mxu0 %v1970
      %2038 = vmatpush.bf16.msra.mxu0 %v1969
      %2039 = vmatpush.bf16.msra.mxu0 %v1968
      %2040 = vmatmul.bf16.gmra.mxu0 %v1772
      %v2041 = vpop.f32.mrf.mxu0
      %v2042 = vadd.f32 0.0, %v2041
      %v2043 = vpop.f32.mrf.mxu0
      %2044 = vdwg.mxu0
      %2045 = vmatpush.bf16.msra.mxu0 %v1983
      %2046 = vmatpush.bf16.msra.mxu0 %v1982
      %2047 = vmatpush.bf16.msra.mxu0 %v1981
      %2048 = vmatpush.bf16.msra.mxu0 %v1980
      %2049 = vmatpush.bf16.msra.mxu0 %v1979
      %2050 = vmatpush.bf16.msra.mxu0 %v1978
      %2051 = vmatpush.bf16.msra.mxu0 %v1977
      %2052 = vmatpush.bf16.msra.mxu0 %v1976
      %2053 = vmatmul.bf16.gmra.mxu0 %v1773
      %v2054 = vpop.f32.mrf.mxu0
      %v2055 = vadd.f32 %v2042, %v2054
      %v2056 = vpop.f32.mrf.mxu0
      %2057 = vdwg.mxu0
      %2058 = vmatpush.bf16.msra.mxu0 %v1991
      %2059 = vmatpush.bf16.msra.mxu0 %v1990
      %2060 = vmatpush.bf16.msra.mxu0 %v1989
      %2061 = vmatpush.bf16.msra.mxu0 %v1988
      %2062 = vmatpush.bf16.msra.mxu0 %v1987
      %2063 = vmatpush.bf16.msra.mxu0 %v1986
      %2064 = vmatpush.bf16.msra.mxu0 %v1985
      %2065 = vmatpush.bf16.msra.mxu0 %v1984
      %2066 = vmatmul.bf16.gmra.mxu0 %v1774
      %v2067 = vpop.f32.mrf.mxu0
      %v2068 = vadd.f32 %v2055, %v2067
      %v2069 = vpop.f32.mrf.mxu0
      %2070 = vdwg.mxu0
      %2071 = vmatpush.bf16.msra.mxu0 %v1999
      %2072 = vmatpush.bf16.msra.mxu0 %v1998
      %2073 = vmatpush.bf16.msra.mxu0 %v1997
      %2074 = vmatpush.bf16.msra.mxu0 %v1996
      %2075 = vmatpush.bf16.msra.mxu0 %v1995
      %2076 = vmatpush.bf16.msra.mxu0 %v1994
      %2077 = vmatpush.bf16.msra.mxu0 %v1993
      %2078 = vmatpush.bf16.msra.mxu0 %v1992
      %2079 = vmatmul.bf16.gmra.mxu0 %v1775
      %v2080 = vpop.f32.mrf.mxu0
      %v2081 = vadd.f32 %v2068, %v2080
      %v2082 = vpop.f32.mrf.mxu0
      %2083 = vdwg.mxu0
      %v2084 = vadd.f32 %v1655, %v2081
      %v2085 = vld [vmem:[%s7 + $0x30] sm:$0xff]
      %v2086 = vld [vmem:[%s7 + $0x38] sm:$0xff]
      %v2087 = vld [vmem:[%s7 + $0x70] sm:$0xff]
      %v2088 = vld [vmem:[%s7 + $0x78] sm:$0xff]
      %v2089 = vld [vmem:[%s7 + $0xb0] sm:$0xff]
      %v2090 = vld [vmem:[%s7 + $0xb8] sm:$0xff]
      %v2091 = vld [vmem:[%s7 + $0xf0] sm:$0xff]
      %v2092 = vld [vmem:[%s7 + $0xf8] sm:$0xff]
      %v2093 = vld [vmem:[%s8 + $0xc] sm:$0xf]
      %v2095 = vperm.slane %v2093, 0
      %v2096 = vperm.slane %v2093, 1
      %v2097 = vperm.slane %v2093, 2
      %v2098 = vperm.slane %v2093, 3
      %v2111 = vunpack.c.l.b16 %v2085
      %v2112 = vunpack.c.h.b16 %v2085
      %v2113 = vunpack.c.l.b16 %v2086
      %v2114 = vunpack.c.h.b16 %v2086
      %v2115 = vunpack.c.l.b16 %v2087
      %v2116 = vunpack.c.h.b16 %v2087
      %v2117 = vunpack.c.l.b16 %v2088
      %v2118 = vunpack.c.h.b16 %v2088
      %v2119 = vunpack.c.l.b16 %v2089
      %v2120 = vunpack.c.h.b16 %v2089
      %v2121 = vunpack.c.l.b16 %v2090
      %v2122 = vunpack.c.h.b16 %v2090
      %v2123 = vunpack.c.l.b16 %v2091
      %v2124 = vunpack.c.h.b16 %v2091
      %v2125 = vunpack.c.l.b16 %v2092
      %v2126 = vunpack.c.h.b16 %v2092
      %v2127 = vpack.c.b16 %v2115, %v2111
      %v2128 = vpack.c.b16 %v2116, %v2112
      %v2129 = vpack.c.b16 %v2117, %v2113
      %v2130 = vpack.c.b16 %v2118, %v2114
      %v2131 = vpack.c.b16 %v2123, %v2119
      %v2132 = vpack.c.b16 %v2124, %v2120
      %v2133 = vpack.c.b16 %v2125, %v2121
      %v2134 = vpack.c.b16 %v2126, %v2122
      %2143 = vmatpush.bf16.msra.mxu0 0
      %2144 = vmatpush.bf16.msra.mxu0 0
      %2145 = vmatpush.bf16.msra.mxu0 0
      %2146 = vmatpush.bf16.msra.mxu0 0
      %2147 = vmatpush.bf16.msra.mxu0 0
      %2148 = vmatpush.bf16.msra.mxu0 0
      %2149 = vmatpush.bf16.msra.mxu0 %v2131
      %2150 = vmatpush.bf16.msra.mxu0 %v2127
      %2151 = vmatmul.bf16.gmra.mxu0 %v862
      %v2152 = vpop.f32.mrf.mxu0
      %v2153 = vadd.f32 %v2095, %v2152
      %v2154 = vpop.f32.mrf.mxu0
      %2155 = vdwg.mxu0
      %2156 = vmatpush.bf16.msra.mxu0 0
      %2157 = vmatpush.bf16.msra.mxu0 0
      %2158 = vmatpush.bf16.msra.mxu0 0
      %2159 = vmatpush.bf16.msra.mxu0 0
      %2160 = vmatpush.bf16.msra.mxu0 0
      %2161 = vmatpush.bf16.msra.mxu0 0
      %2162 = vmatpush.bf16.msra.mxu0 %v2132
      %2163 = vmatpush.bf16.msra.mxu0 %v2128
      %2164 = vmatmul.bf16.gmra.mxu0 %v862
      %v2165 = vpop.f32.mrf.mxu0
      %v2166 = vadd.f32 %v2096, %v2165
      %v2167 = vpop.f32.mrf.mxu0
      %2168 = vdwg.mxu0
      %2169 = vmatpush.bf16.msra.mxu0 0
      %2170 = vmatpush.bf16.msra.mxu0 0
      %2171 = vmatpush.bf16.msra.mxu0 0
      %2172 = vmatpush.bf16.msra.mxu0 0
      %2173 = vmatpush.bf16.msra.mxu0 0
      %2174 = vmatpush.bf16.msra.mxu0 0
      %2175 = vmatpush.bf16.msra.mxu0 %v2133
      %2176 = vmatpush.bf16.msra.mxu0 %v2129
      %2177 = vmatmul.bf16.gmra.mxu0 %v862
      %v2178 = vpop.f32.mrf.mxu0
      %v2179 = vadd.f32 %v2097, %v2178
      %v2180 = vpop.f32.mrf.mxu0
      %2181 = vdwg.mxu0
      %2182 = vmatpush.bf16.msra.mxu0 0
      %2183 = vmatpush.bf16.msra.mxu0 0
      %2184 = vmatpush.bf16.msra.mxu0 0
      %2185 = vmatpush.bf16.msra.mxu0 0
      %2186 = vmatpush.bf16.msra.mxu0 0
      %2187 = vmatpush.bf16.msra.mxu0 0
      %2188 = vmatpush.bf16.msra.mxu0 %v2134
      %2189 = vmatpush.bf16.msra.mxu0 %v2130
      %2190 = vmatmul.bf16.gmra.mxu0 %v862
      %v2191 = vpop.f32.mrf.mxu0
      %v2192 = vadd.f32 %v2098, %v2191
      %v2193 = vpop.f32.mrf.mxu0
      %2194 = vdwg.mxu0
      %v2195 = vmax.f32 %v2153, 0.0
      %v2196 = vmax.f32 %v2166, 0.0
      %v2197 = vmax.f32 %v2179, 0.0
      %v2198 = vmax.f32 %v2192, 0.0
      %v2199 = vpack.c.bf16 %v2195, %v2195
      %v2200 = vpack.c.bf16 %v2196, %v2196
      %v2201 = vpack.c.bf16 %v2197, %v2197
      %v2202 = vpack.c.bf16 %v2198, %v2198
      %v2203 = vld [vmem:[%s9 + $0x300] sm:$0xf]
      %v2204 = vld [vmem:[%s9 + $0x304] sm:$0xf]
      %v2205 = vld [vmem:[%s9 + $0x308] sm:$0xf]
      %v2206 = vld [vmem:[%s9 + $0x30c] sm:$0xf]
      %v2207 = vld [vmem:[%s9 + $0x310] sm:$0xf]
      %v2208 = vld [vmem:[%s9 + $0x314] sm:$0xf]
      %v2209 = vld [vmem:[%s9 + $0x318] sm:$0xf]
      %v2210 = vld [vmem:[%s9 + $0x31c] sm:$0xf]
      %v2211 = vld [vmem:[%s9 + $0x320] sm:$0xf]
      %v2212 = vld [vmem:[%s9 + $0x324] sm:$0xf]
      %v2213 = vld [vmem:[%s9 + $0x328] sm:$0xf]
      %v2214 = vld [vmem:[%s9 + $0x32c] sm:$0xf]
      %v2215 = vld [vmem:[%s9 + $0x330] sm:$0xf]
      %v2216 = vld [vmem:[%s9 + $0x334] sm:$0xf]
      %v2217 = vld [vmem:[%s9 + $0x338] sm:$0xf]
      %v2218 = vld [vmem:[%s9 + $0x33c] sm:$0xf]
      %v2219 = vld [vmem:[%s9 + $0x340] sm:$0xf]
      %v2220 = vld [vmem:[%s9 + $0x344] sm:$0xf]
      %v2221 = vld [vmem:[%s9 + $0x348] sm:$0xf]
      %v2222 = vld [vmem:[%s9 + $0x34c] sm:$0xf]
      %v2223 = vld [vmem:[%s9 + $0x350] sm:$0xf]
      %v2224 = vld [vmem:[%s9 + $0x354] sm:$0xf]
      %v2225 = vld [vmem:[%s9 + $0x358] sm:$0xf]
      %v2226 = vld [vmem:[%s9 + $0x35c] sm:$0xf]
      %v2227 = vld [vmem:[%s9 + $0x360] sm:$0xf]
      %v2228 = vld [vmem:[%s9 + $0x364] sm:$0xf]
      %v2229 = vld [vmem:[%s9 + $0x368] sm:$0xf]
      %v2230 = vld [vmem:[%s9 + $0x36c] sm:$0xf]
      %v2231 = vld [vmem:[%s9 + $0x370] sm:$0xf]
      %v2232 = vld [vmem:[%s9 + $0x374] sm:$0xf]
      %v2233 = vld [vmem:[%s9 + $0x378] sm:$0xf]
      %v2234 = vld [vmem:[%s9 + $0x37c] sm:$0xf]
      %v2235 = vld [vmem:[%s9 + $0x380] sm:$0xf]
      %v2236 = vld [vmem:[%s9 + $0x384] sm:$0xf]
      %v2237 = vld [vmem:[%s9 + $0x388] sm:$0xf]
      %v2238 = vld [vmem:[%s9 + $0x38c] sm:$0xf]
      %v2239 = vld [vmem:[%s9 + $0x390] sm:$0xf]
      %v2240 = vld [vmem:[%s9 + $0x394] sm:$0xf]
      %v2241 = vld [vmem:[%s9 + $0x398] sm:$0xf]
      %v2242 = vld [vmem:[%s9 + $0x39c] sm:$0xf]
      %v2243 = vld [vmem:[%s9 + $0x3a0] sm:$0xf]
      %v2244 = vld [vmem:[%s9 + $0x3a4] sm:$0xf]
      %v2245 = vld [vmem:[%s9 + $0x3a8] sm:$0xf]
      %v2246 = vld [vmem:[%s9 + $0x3ac] sm:$0xf]
      %v2247 = vld [vmem:[%s9 + $0x3b0] sm:$0xf]
      %v2248 = vld [vmem:[%s9 + $0x3b4] sm:$0xf]
      %v2249 = vld [vmem:[%s9 + $0x3b8] sm:$0xf]
      %v2250 = vld [vmem:[%s9 + $0x3bc] sm:$0xf]
      %v2251 = vld [vmem:[%s9 + $0x3c0] sm:$0xf]
      %v2252 = vld [vmem:[%s9 + $0x3c4] sm:$0xf]
      %v2253 = vld [vmem:[%s9 + $0x3c8] sm:$0xf]
      %v2254 = vld [vmem:[%s9 + $0x3cc] sm:$0xf]
      %v2255 = vld [vmem:[%s9 + $0x3d0] sm:$0xf]
      %v2256 = vld [vmem:[%s9 + $0x3d4] sm:$0xf]
      %v2257 = vld [vmem:[%s9 + $0x3d8] sm:$0xf]
      %v2258 = vld [vmem:[%s9 + $0x3dc] sm:$0xf]
      %v2259 = vld [vmem:[%s9 + $0x3e0] sm:$0xf]
      %v2260 = vld [vmem:[%s9 + $0x3e4] sm:$0xf]
      %v2261 = vld [vmem:[%s9 + $0x3e8] sm:$0xf]
      %v2262 = vld [vmem:[%s9 + $0x3ec] sm:$0xf]
      %v2263 = vld [vmem:[%s9 + $0x3f0] sm:$0xf]
      %v2264 = vld [vmem:[%s9 + $0x3f4] sm:$0xf]
      %v2265 = vld [vmem:[%s9 + $0x3f8] sm:$0xf]
      %v2266 = vld [vmem:[%s9 + $0x3fc] sm:$0xf]
      %v2331 = vunpack.c.l.b16 %v2203
      %v2332 = vunpack.c.l.b16 %v2204
      %v2333 = vunpack.c.l.b16 %v2205
      %v2334 = vunpack.c.l.b16 %v2206
      %v2335 = vunpack.c.l.b16 %v2207
      %v2336 = vunpack.c.l.b16 %v2208
      %v2337 = vunpack.c.l.b16 %v2209
      %v2338 = vunpack.c.l.b16 %v2210
      %v2339 = vunpack.c.l.b16 %v2211
      %v2340 = vunpack.c.l.b16 %v2212
      %v2341 = vunpack.c.l.b16 %v2213
      %v2342 = vunpack.c.l.b16 %v2214
      %v2343 = vunpack.c.l.b16 %v2215
      %v2344 = vunpack.c.l.b16 %v2216
      %v2345 = vunpack.c.l.b16 %v2217
      %v2346 = vunpack.c.l.b16 %v2218
      %v2347 = vunpack.c.l.b16 %v2219
      %v2348 = vunpack.c.l.b16 %v2220
      %v2349 = vunpack.c.l.b16 %v2221
      %v2350 = vunpack.c.l.b16 %v2222
      %v2351 = vunpack.c.l.b16 %v2223
      %v2352 = vunpack.c.l.b16 %v2224
      %v2353 = vunpack.c.l.b16 %v2225
      %v2354 = vunpack.c.l.b16 %v2226
      %v2355 = vunpack.c.l.b16 %v2227
      %v2356 = vunpack.c.l.b16 %v2228
      %v2357 = vunpack.c.l.b16 %v2229
      %v2358 = vunpack.c.l.b16 %v2230
      %v2359 = vunpack.c.l.b16 %v2231
      %v2360 = vunpack.c.l.b16 %v2232
      %v2361 = vunpack.c.l.b16 %v2233
      %v2362 = vunpack.c.l.b16 %v2234
      %v2363 = vunpack.c.l.b16 %v2235
      %v2364 = vunpack.c.l.b16 %v2236
      %v2365 = vunpack.c.l.b16 %v2237
      %v2366 = vunpack.c.l.b16 %v2238
      %v2367 = vunpack.c.l.b16 %v2239
      %v2368 = vunpack.c.l.b16 %v2240
      %v2369 = vunpack.c.l.b16 %v2241
      %v2370 = vunpack.c.l.b16 %v2242
      %v2371 = vunpack.c.l.b16 %v2243
      %v2372 = vunpack.c.l.b16 %v2244
      %v2373 = vunpack.c.l.b16 %v2245
      %v2374 = vunpack.c.l.b16 %v2246
      %v2375 = vunpack.c.l.b16 %v2247
      %v2376 = vunpack.c.l.b16 %v2248
      %v2377 = vunpack.c.l.b16 %v2249
      %v2378 = vunpack.c.l.b16 %v2250
      %v2379 = vunpack.c.l.b16 %v2251
      %v2380 = vunpack.c.l.b16 %v2252
      %v2381 = vunpack.c.l.b16 %v2253
      %v2382 = vunpack.c.l.b16 %v2254
      %v2383 = vunpack.c.l.b16 %v2255
      %v2384 = vunpack.c.l.b16 %v2256
      %v2385 = vunpack.c.l.b16 %v2257
      %v2386 = vunpack.c.l.b16 %v2258
      %v2387 = vunpack.c.l.b16 %v2259
      %v2388 = vunpack.c.l.b16 %v2260
      %v2389 = vunpack.c.l.b16 %v2261
      %v2390 = vunpack.c.l.b16 %v2262
      %v2391 = vunpack.c.l.b16 %v2263
      %v2392 = vunpack.c.l.b16 %v2264
      %v2393 = vunpack.c.l.b16 %v2265
      %v2394 = vunpack.c.l.b16 %v2266
      %v2395 = vpack.c.b16 %v2332, %v2331
      %v2396 = vpack.c.b16 %v2334, %v2333
      %v2397 = vpack.c.b16 %v2336, %v2335
      %v2398 = vpack.c.b16 %v2338, %v2337
      %v2399 = vpack.c.b16 %v2340, %v2339
      %v2400 = vpack.c.b16 %v2342, %v2341
      %v2401 = vpack.c.b16 %v2344, %v2343
      %v2402 = vpack.c.b16 %v2346, %v2345
      %v2403 = vpack.c.b16 %v2348, %v2347
      %v2404 = vpack.c.b16 %v2350, %v2349
      %v2405 = vpack.c.b16 %v2352, %v2351
      %v2406 = vpack.c.b16 %v2354, %v2353
      %v2407 = vpack.c.b16 %v2356, %v2355
      %v2408 = vpack.c.b16 %v2358, %v2357
      %v2409 = vpack.c.b16 %v2360, %v2359
      %v2410 = vpack.c.b16 %v2362, %v2361
      %v2411 = vpack.c.b16 %v2364, %v2363
      %v2412 = vpack.c.b16 %v2366, %v2365
      %v2413 = vpack.c.b16 %v2368, %v2367
      %v2414 = vpack.c.b16 %v2370, %v2369
      %v2415 = vpack.c.b16 %v2372, %v2371
      %v2416 = vpack.c.b16 %v2374, %v2373
      %v2417 = vpack.c.b16 %v2376, %v2375
      %v2418 = vpack.c.b16 %v2378, %v2377
      %v2419 = vpack.c.b16 %v2380, %v2379
      %v2420 = vpack.c.b16 %v2382, %v2381
      %v2421 = vpack.c.b16 %v2384, %v2383
      %v2422 = vpack.c.b16 %v2386, %v2385
      %v2423 = vpack.c.b16 %v2388, %v2387
      %v2424 = vpack.c.b16 %v2390, %v2389
      %v2425 = vpack.c.b16 %v2392, %v2391
      %v2426 = vpack.c.b16 %v2394, %v2393
      %2459 = vmatpush.bf16.msra.mxu0 %v2402
      %2460 = vmatpush.bf16.msra.mxu0 %v2401
      %2461 = vmatpush.bf16.msra.mxu0 %v2400
      %2462 = vmatpush.bf16.msra.mxu0 %v2399
      %2463 = vmatpush.bf16.msra.mxu0 %v2398
      %2464 = vmatpush.bf16.msra.mxu0 %v2397
      %2465 = vmatpush.bf16.msra.mxu0 %v2396
      %2466 = vmatpush.bf16.msra.mxu0 %v2395
      %2467 = vmatmul.bf16.gmra.mxu0 %v2199
      %v2468 = vpop.f32.mrf.mxu0
      %v2469 = vadd.f32 0.0, %v2468
      %v2470 = vpop.f32.mrf.mxu0
      %2471 = vdwg.mxu0
      %2472 = vmatpush.bf16.msra.mxu0 %v2410
      %2473 = vmatpush.bf16.msra.mxu0 %v2409
      %2474 = vmatpush.bf16.msra.mxu0 %v2408
      %2475 = vmatpush.bf16.msra.mxu0 %v2407
      %2476 = vmatpush.bf16.msra.mxu0 %v2406
      %2477 = vmatpush.bf16.msra.mxu0 %v2405
      %2478 = vmatpush.bf16.msra.mxu0 %v2404
      %2479 = vmatpush.bf16.msra.mxu0 %v2403
      %2480 = vmatmul.bf16.gmra.mxu0 %v2200
      %v2481 = vpop.f32.mrf.mxu0
      %v2482 = vadd.f32 %v2469, %v2481
      %v2483 = vpop.f32.mrf.mxu0
      %2484 = vdwg.mxu0
      %2485 = vmatpush.bf16.msra.mxu0 %v2418
      %2486 = vmatpush.bf16.msra.mxu0 %v2417
      %2487 = vmatpush.bf16.msra.mxu0 %v2416
      %2488 = vmatpush.bf16.msra.mxu0 %v2415
      %2489 = vmatpush.bf16.msra.mxu0 %v2414
      %2490 = vmatpush.bf16.msra.mxu0 %v2413
      %2491 = vmatpush.bf16.msra.mxu0 %v2412
      %2492 = vmatpush.bf16.msra.mxu0 %v2411
      %2493 = vmatmul.bf16.gmra.mxu0 %v2201
      %v2494 = vpop.f32.mrf.mxu0
      %v2495 = vadd.f32 %v2482, %v2494
      %v2496 = vpop.f32.mrf.mxu0
      %2497 = vdwg.mxu0
      %2498 = vmatpush.bf16.msra.mxu0 %v2426
      %2499 = vmatpush.bf16.msra.mxu0 %v2425
      %2500 = vmatpush.bf16.msra.mxu0 %v2424
      %2501 = vmatpush.bf16.msra.mxu0 %v2423
      %2502 = vmatpush.bf16.msra.mxu0 %v2422
      %2503 = vmatpush.bf16.msra.mxu0 %v2421
      %2504 = vmatpush.bf16.msra.mxu0 %v2420
      %2505 = vmatpush.bf16.msra.mxu0 %v2419
      %2506 = vmatmul.bf16.gmra.mxu0 %v2202
      %v2507 = vpop.f32.mrf.mxu0
      %v2508 = vadd.f32 %v2495, %v2507
      %v2509 = vpop.f32.mrf.mxu0
      %2510 = vdwg.mxu0
      %v2511 = vadd.f32 %v2084, %v2508
      %v2512 = vld [vmem:[%s10] sm:$0x1]
      %v2514 = vperm.slane %v2512, 0
      %v2516 = vadd.f32 %v2511, %v2514
      %v2517 = vadd.f32 %v801, %v2516
      %v2518 = vld [vmem:[%s11] sm:$0x1]
      %v2519 = vld [vmem:[%s12] sm:$0x1]
      %v2520 = vsel %vm459, %v2517, 0.0
      %2521 = vadd.xlane.f32.xlu0 %v2520
      %v2522 = vpop.xlane.xlu0 %2521
      %v2523 = vmul.f32 %v2522, %v774
      %v2524 = vsub.f32 %v2517, %v2523
      %v2525 = vmul.f32 %v2524, %v2524
      %v2526 = vsel %vm459, %v2525, 0.0
      %2527 = vadd.xlane.f32.xlu0 %v2526
      %v2528 = vpop.xlane.xlu0 %2527
      %v2529 = vmul.f32 %v2528, %v774
      %v2530 = vadd.f32 %v2529, 1e-05
      %v2531 = vrsqrt.pop %v2530
      %v2532 = vmul.f32 %v2531, %v2530
      %v2533 = vmul.f32 %v2532, %v2531
      %v2534 = vmul.f32 0.5, %v2533
      %v2535 = vsub.f32 1.5, %v2534
      %v2536 = vmul.f32 %v2531, %v2535
      %vm2537 = vweird.f32 %v2530
      %vm2538 = vweird.f32 %v2531
      %vm2539 = vmor %vm2537, %vm2538
      %v2540 = vsel %vm2539, %v2531, %v2536
      %v2541 = vmul.f32 %v2524, %v2540
      %v2543 = vperm.slane %v2518, 0
      %v2545 = vmul.f32 %v2541, %v2543
      %v2547 = vperm.slane %v2519, 0
      %v2549 = vadd.f32 %v2545, %v2547
      %2550 = vst.msk [vmem:[%s435] sm:$0xff] %vm459, %v2549
      %p2551 = scmp.lt.s32.totalorder %s24, 1
      %s2552 = scalar_select %p2551, %s24, 1
      %s2553 = smul.addr %s2552, 8
      %s2554 = scalar_lea.vmem %s13, %s2553
      // Predicated region
      $region73: #{transformer_forward.5} parent=71 // pred_check
        %p2555 = pneg %p320
      $region74: #{transformer_forward.5} parent=71 // pred_check_branch
        %2557 = sbr.rel (%p2555) target = $region76
      $region75: #{transformer_forward.5} parent=71 // pred_region
        _
      $region76: #{transformer_forward.5} parent=71 // pred_fallthru
        _
    $region72: #{transformer_forward.5} parent=5 // pred_fallthru
      _
    %p2558 = scmp.le.s32.totalorder 2, %s19
    // Predicated region
    $region77: #{transformer_forward.5} parent=5 // pred_check
      %p2559 = pneg %p2558
    $region78: #{transformer_forward.5} parent=5 // pred_check_branch
      %2561 = sbr.rel (%p2559) target = $region80
    $region79: #{transformer_forward.5} parent=5 // pred_region
      %s2562 = ssub.s32 %s19, 2
      // Predicated region
      $region81: #{transformer_forward.5} parent=79 // pred_check
        %p2563 = pneg %p326
      $region82: #{transformer_forward.5} parent=79 // pred_check_branch
        %2565 = sbr.rel (%p2563) target = $region84
      $region83: #{transformer_forward.5} parent=79 // pred_region
        %p2566 = scmp.lt.s32.totalorder %s25, 1
        %s2567 = scalar_select %p2566, %s25, 1
        %s2568 = smul.addr %s2567, 8
        %s2569 = scalar_lea.vmem %s13, %s2568
      $region84: #{transformer_forward.5} parent=79 // pred_fallthru
        _
    $region80: #{transformer_forward.5} parent=5 // pred_fallthru
      _
  $region6: #{transformer_forward.5} parent=0 // loop_footer
    %s23 = sadd.s32 1, %s19
  $region7: #{transformer_forward.5} parent=0 // loop_footer_branch
    %18 = sbr.rel target = $region3
  $region8: #{transformer_forward.5} parent=0 // loop_exit
    _

</llo_original>
